<compile_context>
chip_gen: v7x
topology: tpu7x:2x2x1
jax: 0.10.0
libtpu: 0.0.40
codegen_flags: <defaults>
</compile_context>

<pallas_src>
import functools

import jax
import jax.numpy as jnp
import numpy as np
from jax.experimental import pallas as pl
from jax.experimental.pallas import tpu as pltpu


# ----------------------------------------------------------------------------
# Pallas kernel: one grid step == one LSTM layer (grid=(L,), sequential)
# ----------------------------------------------------------------------------
def _lstm_layer_kernel(x_ref, w_ih_ref, w_hh_ref, b_ref, lin_w_ref, lin_b_ref,
                       out_ref, gates_scr, seq_scr, *, T, B, H, cdt):
    """
    x_ref     : (T*B, H)   bf16  time-major input, lane-padded to H columns
    w_ih_ref  : (H, 4H)    bf16  this layer's input->gate weights (transposed,
                                 gate columns pre-permuted to [i|f|o|g])
    w_hh_ref  : (H, 4H)    bf16  this layer's hidden->gate weights (transposed)
    b_ref     : (1, 4H)    f32   combined bias b_ih + b_hh (permuted)
    lin_w_ref : (H, O)     bf16  final linear weight (transposed)
    lin_b_ref : (1, O)     f32   final linear bias
    out_ref   : (B, O)     f32   network output (written on the last layer only)
    gates_scr : (T*B, 4H)  f32   VMEM: hoisted input-projection pre-activations
    seq_scr   : (T*B, H)   f32   VMEM: previous/current layer's hidden sequence
    """
    layer = pl.program_id(0)
    last_layer = pl.num_programs(0) - 1

    # Layer 0: seed the sequence buffer with the (lane-padded) network input.
    @pl.when(layer == 0)
    def _():
        seq_scr[...] = x_ref[...].astype(jnp.float32)

    # Hoisted input projection for the whole sequence: ONE (T*B,H)@(H,4H) matmul
    # off the serial recurrence path.
    gates_scr[...] = (
        jnp.dot(seq_scr[...].astype(jnp.bfloat16), w_ih_ref[...],
                preferred_element_type=jnp.float32)
        + b_ref[...]
    )

    # Load W_hh once per layer so every unrolled step reuses the same MXU RHS.
    # TODO(synk): if the bundle dump shows the 128x512 RHS being re-pushed every
    # step, drive the MXU explicitly (pltpu.matmul_push_rhs / matmul_acc_lhs /
    # matmul_pop) to make W_hh weight-stationary across the T steps.
    w_hh = w_hh_ref[...]

    hb = jnp.zeros((B, H), jnp.bfloat16)    # hidden state as MXU operand
    c = jnp.zeros((B, H), jnp.float32)      # cell state stays f32

    for t in range(T):   # short fixed loop; the grid bounds live ranges per layer
        g = (gates_scr[t * B:(t + 1) * B, :]
             + jnp.dot(hb, w_hh, preferred_element_type=jnp.float32)
             ).astype(cdt)
        # Gates packed [i | f | o | g]: one tanh-based sigmoid over a contiguous
        # 3H slab + one tanh over H lanes (sigmoid(x) = 0.5*(tanh(x/2)+1)).
        sig = 0.5 * (jnp.tanh(0.5 * g[:, :3 * H]) + 1.0)
        i_g = sig[:, 0 * H:1 * H]
        f_g = sig[:, 1 * H:2 * H]
        o_g = sig[:, 2 * H:3 * H]
        g_g = jnp.tanh(g[:, 3 * H:4 * H])
        c = f_g.astype(jnp.float32) * c + (i_g * g_g).astype(jnp.float32)
        h = o_g * jnp.tanh(c.astype(cdt))
        hb = h.astype(jnp.bfloat16)
        # 4 KiB store, off the h/c dependency chain; the next layer reads it.
        seq_scr[t * B:(t + 1) * B, :] = h.astype(jnp.float32)

    # Final Linear on the LIVE last-step hidden state (no seq_scr reload).
    @pl.when(layer == last_layer)
    def _():
        out_ref[...] = (
            jnp.dot(hb, lin_w_ref[...], preferred_element_type=jnp.float32)
            + lin_b_ref[...]
        )


# ----------------------------------------------------------------------------
# Wrapper
# ----------------------------------------------------------------------------
def _reorder_gates(w, H):
    """Permute torch's [i|f|g|o] gate blocks (last axis) to [i|f|o|g]."""
    return jnp.concatenate(
        [w[..., :2 * H], w[..., 3 * H:4 * H], w[..., 2 * H:3 * H]], axis=-1)


@jax.jit
def lstm_forward(x, params):
    """Equivalent of LSTM.forward with zero initial state (stateful=False).

    x: (B, T, D_in)  batch_first, like PyTorch.
    returns: (B, output_dim)  float32
    """
    B, T, Din = x.shape
    layers = params["layers"]
    L = len(layers)
    H = layers[0][1].shape[0]
    O = params["lin_w_t"].shape[1]

    assert B % 8 == 0, "batch must be a multiple of 8 (sublane alignment)"
    assert H % 128 == 0, "hidden_dim must be a multiple of 128 (lane alignment)"
    assert Din <= H, "input_dim > hidden_dim not supported by uniform layer packing"
    # TODO(synk): for Din > H keep layer 0 un-padded with a dedicated W_ih input.

    # bf16 element-wise gate math only where the VPU/EUP have a bf16 path.
    kind = jax.devices()[0].device_kind.lower()
    use_bf16_gates = not any(v in kind for v in ("v2", "v3", "v4", "v5"))
    cdt = jnp.bfloat16 if use_bf16_gates else jnp.float32

    # Time-major, flattened so rows [t*B:(t+1)*B] hold time step t; pad the
    # feature dim to H lanes so layer 0 is uniform with layers 1..L-1.
    x_tm = jnp.transpose(x, (1, 0, 2)).reshape(T * B, Din)
    x_tm = jnp.pad(x_tm, ((0, 0), (0, H - Din))).astype(jnp.bfloat16)

    # Pack weights: gate columns permuted to [i|f|o|g], bf16 MXU operands,
    # f32 biases, layer-0 W_ih zero-padded on the input dim.
    w_ih_l, w_hh_l, b_l = [], [], []
    for li, (w_ih_t, w_hh_t, b) in enumerate(layers):
        w_ih_t = _reorder_gates(w_ih_t, H)
        if li == 0:
            w_ih_t = jnp.pad(w_ih_t, ((0, H - Din), (0, 0)))
        w_ih_l.append(w_ih_t.astype(jnp.bfloat16))
        w_hh_l.append(_reorder_gates(w_hh_t, H).astype(jnp.bfloat16))
        b_l.append(_reorder_gates(b, H).astype(jnp.float32))
    w_ih_all = jnp.stack(w_ih_l)                      # (L, H, 4H) bf16
    w_hh_all = jnp.stack(w_hh_l)                      # (L, H, 4H) bf16
    b_all = jnp.stack(b_l)                            # (L, 1, 4H) f32
    lin_w = params["lin_w_t"].astype(jnp.bfloat16)    # (H, O)
    lin_b = params["lin_b"].astype(jnp.float32)       # (1, O)

    kernel = functools.partial(_lstm_layer_kernel, T=T, B=B, H=H, cdt=cdt)
    return pl.pallas_call(
        kernel,
        out_shape=jax.ShapeDtypeStruct((B, O), jnp.float32),
        grid=(L,),
        in_specs=[
            pl.BlockSpec((T * B, H), lambda l: (0, 0)),           # x (resident)
            pl.BlockSpec((None, H, 4 * H), lambda l: (l, 0, 0)),  # W_ih[l]
            pl.BlockSpec((None, H, 4 * H), lambda l: (l, 0, 0)),  # W_hh[l]
            pl.BlockSpec((None, 1, 4 * H), lambda l: (l, 0, 0)),  # bias[l]
            pl.BlockSpec((H, O), lambda l: (0, 0)),               # lin W
            pl.BlockSpec((1, O), lambda l: (0, 0)),               # lin b
        ],
        out_specs=pl.BlockSpec((B, O), lambda l: (0, 0)),
        scratch_shapes=[
            # NOTE: both scale with T*B; block gates_scr along time before this
            # approaches the v7x 64 MiB VMEM budget at large T/B/H.
            pltpu.VMEM((T * B, 4 * H), jnp.float32),   # hoisted gate pre-acts
            pltpu.VMEM((T * B, H), jnp.float32),       # hidden sequence
        ],
        compiler_params=pltpu.CompilerParams(
            dimension_semantics=("arbitrary",),        # layers are sequential
        ),
    )(x_tm, w_ih_all, w_hh_all, b_all, lin_w, lin_b)


# ----------------------------------------------------------------------------
# Deterministic parameter init (torch.nn.LSTM-style uniform(-1/sqrt(H), 1/sqrt(H)))
# ----------------------------------------------------------------------------
def init_params(key, input_dim, hidden_dim, layer_dim, output_dim):
    bound = 1.0 / np.sqrt(hidden_dim)
    layers = []
    for layer in range(layer_dim):
        d_in = input_dim if layer == 0 else hidden_dim
        key, k1, k2, k3, k4 = jax.random.split(key, 5)
        w_ih = jax.random.uniform(k1, (4 * hidden_dim, d_in),
                                  minval=-bound, maxval=bound, dtype=jnp.float32)
        w_hh = jax.random.uniform(k2, (4 * hidden_dim, hidden_dim),
                                  minval=-bound, maxval=bound, dtype=jnp.float32)
        b_ih = jax.random.uniform(k3, (4 * hidden_dim,),
                                  minval=-bound, maxval=bound, dtype=jnp.float32)
        b_hh = jax.random.uniform(k4, (4 * hidden_dim,),
                                  minval=-bound, maxval=bound, dtype=jnp.float32)
        layers.append((w_ih.T, w_hh.T, (b_ih + b_hh)[None, :]))
    key, k1, k2 = jax.random.split(key, 3)
    lin_bound = 1.0 / np.sqrt(hidden_dim)
    lin_w = jax.random.uniform(k1, (output_dim, hidden_dim),
                               minval=-lin_bound, maxval=lin_bound,
                               dtype=jnp.float32)
    lin_b = jax.random.uniform(k2, (output_dim,),
                               minval=-lin_bound, maxval=lin_bound,
                               dtype=jnp.float32)
    return {"layers": layers, "lin_w_t": lin_w.T, "lin_b": lin_b[None, :]}


# ----------------------------------------------------------------------------
# Pure-JAX f32 reference (torch gate order [i,f,g,o]) for correctness checking
# ----------------------------------------------------------------------------
def lstm_forward_ref(x, params):
    x_tm = jnp.transpose(x, (1, 0, 2)).astype(jnp.float32)
    h_seq = x_tm
    for (w_ih_t, w_hh_t, b) in params["layers"]:
        T, B, _ = h_seq.shape
        H = w_hh_t.shape[0]
        h = jnp.zeros((B, H), jnp.float32)
        c = jnp.zeros((B, H), jnp.float32)
        outs = []
        for t in range(T):
            gates = h_seq[t] @ w_ih_t + h @ w_hh_t + b
            i_g = jax.nn.sigmoid(gates[:, 0 * H:1 * H])
            f_g = jax.nn.sigmoid(gates[:, 1 * H:2 * H])
            g_g = jnp.tanh(gates[:, 2 * H:3 * H])
            o_g = jax.nn.sigmoid(gates[:, 3 * H:4 * H])
            c = f_g * c + i_g * g_g
            h = o_g * jnp.tanh(c)
            outs.append(h)
        h_seq = jnp.stack(outs, axis=0)
    return h_seq[-1] @ params["lin_w_t"] + params["lin_b"]


# ----------------------------------------------------------------------------
if __name__ == "__main__":
    # Small shapes consistent with the module (batch_first LSTM input).
    batch = 8
    seq = 8
    input_dim = 16
    hidden_dim = 128
    layer_dim = 4
    output_dim = 1

    key = jax.random.PRNGKey(0)
    key, pkey, xkey = jax.random.split(key, 3)
    params = init_params(pkey, input_dim, hidden_dim, layer_dim, output_dim)
    x = jax.random.normal(xkey, (batch, seq, input_dim), dtype=jnp.float32)

    out = lstm_forward(x, params)
    out = jax.block_until_ready(out)
    assert out.shape == (batch, output_dim), out.shape

    ref = lstm_forward_ref(x, params)
    # bf16 matmul operands (+ bf16 gate math on v6e/v7x, cell state kept f32)
    # vs. the f32 reference.
    np.testing.assert_allclose(np.asarray(out), np.asarray(ref),
                               rtol=3e-2, atol=3e-2)

    print("KERNEL_OK")
</pallas_src>

<mosaic_0001>
module attributes {stable_mosaic.version = 11 : i64} {
  func.func @_lstm_layer_kernel(%arg0: i32, %arg1: memref<64x128xbf16, #tpu.memory_space<vmem>>, %arg2: memref<1x128x512xbf16, #tpu.memory_space<vmem>>, %arg3: memref<1x128x512xbf16, #tpu.memory_space<vmem>>, %arg4: memref<1x1x512xf32, #tpu.memory_space<vmem>>, %arg5: memref<128x1xbf16, #tpu.memory_space<vmem>>, %arg6: memref<1x1xf32, #tpu.memory_space<vmem>>, %arg7: memref<8x1xf32, #tpu.memory_space<vmem>>, %arg8: memref<64x512xf32, #tpu.memory_space<vmem>>, %arg9: memref<64x128xf32, #tpu.memory_space<vmem>>) attributes {dimension_semantics = [#tpu.dimension_semantics<arbitrary>], iteration_bounds = array<i64: 4>, scalar_prefetch = 0 : i64, scratch_operands = 2 : i64, tpu.core_type = #tpu.core_type<tc>, window_params = [{pipeline_mode = #tpu.pipeline_mode<synchronous>, transform_indices = @transform_0, window_bounds = array<i64: 64, 128>}, {transform_indices = @transform_1, window_bounds = array<i64: 1, 128, 512>}, {transform_indices = @transform_2, window_bounds = array<i64: 1, 128, 512>}, {transform_indices = @transform_3, window_bounds = array<i64: 1, 1, 512>}, {pipeline_mode = #tpu.pipeline_mode<synchronous>, transform_indices = @transform_4, window_bounds = array<i64: 128, 1>}, {pipeline_mode = #tpu.pipeline_mode<synchronous>, transform_indices = @transform_5, window_bounds = array<i64: 1, 1>}, {pipeline_mode = #tpu.pipeline_mode<synchronous>, transform_indices = @transform_6, window_bounds = array<i64: 8, 1>}]} {
    %c0_i32 = arith.constant 0 : i32
    %0 = arith.cmpi eq, %arg0, %c0_i32 : i32
    %1 = arith.extui %0 : i1 to i32
    %c0_i32_0 = arith.constant 0 : i32
    %2 = arith.cmpi ne, %1, %c0_i32_0 : i32
    scf.if %2 {
      %c0_73 = arith.constant 0 : index
      %c0_74 = arith.constant 0 : index
      %236 = vector.load %arg1[%c0_73, %c0_74] : memref<64x128xbf16, #tpu.memory_space<vmem>>, vector<64x128xbf16>
      %237 = arith.extf %236 : vector<64x128xbf16> to vector<64x128xf32>
      %c0_75 = arith.constant 0 : index
      %c0_76 = arith.constant 0 : index
      %238 = vector.load %arg9[%c0_75, %c0_76] : memref<64x128xf32, #tpu.memory_space<vmem>>, vector<64x128xf32>
      tpu.vector_store %arg9[%c0_75, %c0_76], %237 {strides = array<i32>} : memref<64x128xf32, #tpu.memory_space<vmem>>, vector<64x128xf32>,
    } else {
    }
    %c0 = arith.constant 0 : index
    %c0_1 = arith.constant 0 : index
    %3 = vector.load %arg9[%c0, %c0_1] : memref<64x128xf32, #tpu.memory_space<vmem>>, vector<64x128xf32>
    %4 = arith.truncf %3 : vector<64x128xf32> to vector<64x128xbf16>
    %c0_2 = arith.constant 0 : index
    %c0_3 = arith.constant 0 : index
    %c0_4 = arith.constant 0 : index
    %5 = vector.load %arg2[%c0_2, %c0_3, %c0_4] : memref<1x128x512xbf16, #tpu.memory_space<vmem>>, vector<1x128x512xbf16>
    %6 = vector.shape_cast %5 : vector<1x128x512xbf16> to vector<128x512xbf16>
    %cst = arith.constant dense<0.000000e+00> : vector<64x512xf32>
    %7 = tpu.matmul %4, %6, %cst {dimension_numbers = #tpu.dot_dimension_numbers<[1], [0], [0], [1], [0, 0, 1, 1], [], []>} : vector<64x128xbf16>, vector<128x512xbf16>, vector<64x512xf32> -> vector<64x512xf32>
    %c0_5 = arith.constant 0 : index
    %c0_6 = arith.constant 0 : index
    %c0_7 = arith.constant 0 : index
    %8 = vector.load %arg4[%c0_5, %c0_6, %c0_7] : memref<1x1x512xf32, #tpu.memory_space<vmem>>, vector<1x1x512xf32>
    %9 = vector.shape_cast %8 : vector<1x1x512xf32> to vector<1x512xf32>
    %10 = vector.broadcast %9 : vector<1x512xf32> to vector<64x512xf32>
    %11 = arith.addf %7, %10 : vector<64x512xf32>
    %c0_8 = arith.constant 0 : index
    %c0_9 = arith.constant 0 : index
    %12 = vector.load %arg8[%c0_8, %c0_9] : memref<64x512xf32, #tpu.memory_space<vmem>>, vector<64x512xf32>
    tpu.vector_store %arg8[%c0_8, %c0_9], %11 {strides = array<i32>} : memref<64x512xf32, #tpu.memory_space<vmem>>, vector<64x512xf32>,
    %c0_10 = arith.constant 0 : index
    %c0_11 = arith.constant 0 : index
    %c0_12 = arith.constant 0 : index
    %13 = vector.load %arg3[%c0_10, %c0_11, %c0_12] : memref<1x128x512xbf16, #tpu.memory_space<vmem>>, vector<1x128x512xbf16>
    %14 = vector.shape_cast %13 : vector<1x128x512xbf16> to vector<128x512xbf16>
    %cst_13 = arith.constant 0.000000e+00 : bf16
    %15 = vector.broadcast %cst_13 : bf16 to vector<8x128xbf16>
    %cst_14 = arith.constant 0.000000e+00 : f32
    %16 = vector.broadcast %cst_14 : f32 to vector<8x128xf32>
    %c0_15 = arith.constant 0 : index
    %c0_16 = arith.constant 0 : index
    %17 = vector.load %arg8[%c0_15, %c0_16] : memref<64x512xf32, #tpu.memory_space<vmem>>, vector<8x512xf32>
    %cst_17 = arith.constant dense<0.000000e+00> : vector<8x512xf32>
    %18 = tpu.matmul %15, %14, %cst_17 {dimension_numbers = #tpu.dot_dimension_numbers<[1], [0], [0], [1], [0, 0, 1, 1], [], []>} : vector<8x128xbf16>, vector<128x512xbf16>, vector<8x512xf32> -> vector<8x512xf32>
    %19 = arith.addf %17, %18 : vector<8x512xf32>
    %20 = arith.truncf %19 : vector<8x512xf32> to vector<8x512xbf16>
    %21 = vector.extract_strided_slice %20 {offsets = [0, 0], sizes = [8, 384], strides = [1, 1]} : vector<8x512xbf16> to vector<8x384xbf16>
    %cst_18 = arith.constant 5.000000e-01 : bf16
    %22 = vector.broadcast %cst_18 : bf16 to vector<8x384xbf16>
    %23 = arith.mulf %22, %21 : vector<8x384xbf16>
    %24 = math.tanh %23 : vector<8x384xbf16>
    %cst_19 = arith.constant 1.000000e+00 : bf16
    %25 = vector.broadcast %cst_19 : bf16 to vector<8x384xbf16>
    %26 = arith.addf %24, %25 : vector<8x384xbf16>
    %cst_20 = arith.constant 5.000000e-01 : bf16
    %27 = vector.broadcast %cst_20 : bf16 to vector<8x384xbf16>
    %28 = arith.mulf %27, %26 : vector<8x384xbf16>
    %29 = vector.extract_strided_slice %28 {offsets = [0, 0], sizes = [8, 128], strides = [1, 1]} : vector<8x384xbf16> to vector<8x128xbf16>
    %30 = vector.extract_strided_slice %28 {offsets = [0, 128], sizes = [8, 128], strides = [1, 1]} : vector<8x384xbf16> to vector<8x128xbf16>
    %31 = vector.extract_strided_slice %28 {offsets = [0, 256], sizes = [8, 128], strides = [1, 1]} : vector<8x384xbf16> to vector<8x128xbf16>
    %32 = vector.extract_strided_slice %20 {offsets = [0, 384], sizes = [8, 128], strides = [1, 1]} : vector<8x512xbf16> to vector<8x128xbf16>
    %33 = math.tanh %32 : vector<8x128xbf16>
    %34 = arith.extf %30 : vector<8x128xbf16> to vector<8x128xf32>
    %35 = arith.mulf %34, %16 : vector<8x128xf32>
    %36 = arith.mulf %29, %33 : vector<8x128xbf16>
    %37 = arith.extf %36 : vector<8x128xbf16> to vector<8x128xf32>
    %38 = arith.addf %35, %37 : vector<8x128xf32>
    %39 = arith.truncf %38 : vector<8x128xf32> to vector<8x128xbf16>
    %40 = math.tanh %39 : vector<8x128xbf16>
    %41 = arith.mulf %31, %40 : vector<8x128xbf16>
    %42 = arith.extf %41 : vector<8x128xbf16> to vector<8x128xf32>
    %c0_21 = arith.constant 0 : index
    %c0_22 = arith.constant 0 : index
    %43 = vector.load %arg9[%c0_21, %c0_22] : memref<64x128xf32, #tpu.memory_space<vmem>>, vector<8x128xf32>
    tpu.vector_store %arg9[%c0_21, %c0_22], %42 {strides = array<i32>} : memref<64x128xf32, #tpu.memory_space<vmem>>, vector<8x128xf32>,
    %c8 = arith.constant 8 : index
    %c0_23 = arith.constant 0 : index
    %44 = vector.load %arg8[%c8, %c0_23] : memref<64x512xf32, #tpu.memory_space<vmem>>, vector<8x512xf32>
    %cst_24 = arith.constant dense<0.000000e+00> : vector<8x512xf32>
    %45 = tpu.matmul %41, %14, %cst_24 {dimension_numbers = #tpu.dot_dimension_numbers<[1], [0], [0], [1], [0, 0, 1, 1], [], []>} : vector<8x128xbf16>, vector<128x512xbf16>, vector<8x512xf32> -> vector<8x512xf32>
    %46 = arith.addf %44, %45 : vector<8x512xf32>
    %47 = arith.truncf %46 : vector<8x512xf32> to vector<8x512xbf16>
    %48 = vector.extract_strided_slice %47 {offsets = [0, 0], sizes = [8, 384], strides = [1, 1]} : vector<8x512xbf16> to vector<8x384xbf16>
    %cst_25 = arith.constant 5.000000e-01 : bf16
    %49 = vector.broadcast %cst_25 : bf16 to vector<8x384xbf16>
    %50 = arith.mulf %49, %48 : vector<8x384xbf16>
    %51 = math.tanh %50 : vector<8x384xbf16>
    %cst_26 = arith.constant 1.000000e+00 : bf16
    %52 = vector.broadcast %cst_26 : bf16 to vector<8x384xbf16>
    %53 = arith.addf %51, %52 : vector<8x384xbf16>
    %cst_27 = arith.constant 5.000000e-01 : bf16
    %54 = vector.broadcast %cst_27 : bf16 to vector<8x384xbf16>
    %55 = arith.mulf %54, %53 : vector<8x384xbf16>
    %56 = vector.extract_strided_slice %55 {offsets = [0, 0], sizes = [8, 128], strides = [1, 1]} : vector<8x384xbf16> to vector<8x128xbf16>
    %57 = vector.extract_strided_slice %55 {offsets = [0, 128], sizes = [8, 128], strides = [1, 1]} : vector<8x384xbf16> to vector<8x128xbf16>
    %58 = vector.extract_strided_slice %55 {offsets = [0, 256], sizes = [8, 128], strides = [1, 1]} : vector<8x384xbf16> to vector<8x128xbf16>
    %59 = vector.extract_strided_slice %47 {offsets = [0, 384], sizes = [8, 128], strides = [1, 1]} : vector<8x512xbf16> to vector<8x128xbf16>
    %60 = math.tanh %59 : vector<8x128xbf16>
    %61 = arith.extf %57 : vector<8x128xbf16> to vector<8x128xf32>
    %62 = arith.mulf %61, %38 : vector<8x128xf32>
    %63 = arith.mulf %56, %60 : vector<8x128xbf16>
    %64 = arith.extf %63 : vector<8x128xbf16> to vector<8x128xf32>
    %65 = arith.addf %62, %64 : vector<8x128xf32>
    %66 = arith.truncf %65 : vector<8x128xf32> to vector<8x128xbf16>
    %67 = math.tanh %66 : vector<8x128xbf16>
    %68 = arith.mulf %58, %67 : vector<8x128xbf16>
    %69 = arith.extf %68 : vector<8x128xbf16> to vector<8x128xf32>
    %c8_28 = arith.constant 8 : index
    %c0_29 = arith.constant 0 : index
    %70 = vector.load %arg9[%c8_28, %c0_29] : memref<64x128xf32, #tpu.memory_space<vmem>>, vector<8x128xf32>
    tpu.vector_store %arg9[%c8_28, %c0_29], %69 {strides = array<i32>} : memref<64x128xf32, #tpu.memory_space<vmem>>, vector<8x128xf32>,
    %c16 = arith.constant 16 : index
    %c0_30 = arith.constant 0 : index
    %71 = vector.load %arg8[%c16, %c0_30] : memref<64x512xf32, #tpu.memory_space<vmem>>, vector<8x512xf32>
    %cst_31 = arith.constant dense<0.000000e+00> : vector<8x512xf32>
    %72 = tpu.matmul %68, %14, %cst_31 {dimension_numbers = #tpu.dot_dimension_numbers<[1], [0], [0], [1], [0, 0, 1, 1], [], []>} : vector<8x128xbf16>, vector<128x512xbf16>, vector<8x512xf32> -> vector<8x512xf32>
    %73 = arith.addf %71, %72 : vector<8x512xf32>
    %74 = arith.truncf %73 : vector<8x512xf32> to vector<8x512xbf16>
    %75 = vector.extract_strided_slice %74 {offsets = [0, 0], sizes = [8, 384], strides = [1, 1]} : vector<8x512xbf16> to vector<8x384xbf16>
    %cst_32 = arith.constant 5.000000e-01 : bf16
    %76 = vector.broadcast %cst_32 : bf16 to vector<8x384xbf16>
    %77 = arith.mulf %76, %75 : vector<8x384xbf16>
    %78 = math.tanh %77 : vector<8x384xbf16>
    %cst_33 = arith.constant 1.000000e+00 : bf16
    %79 = vector.broadcast %cst_33 : bf16 to vector<8x384xbf16>
    %80 = arith.addf %78, %79 : vector<8x384xbf16>
    %cst_34 = arith.constant 5.000000e-01 : bf16
    %81 = vector.broadcast %cst_34 : bf16 to vector<8x384xbf16>
    %82 = arith.mulf %81, %80 : vector<8x384xbf16>
    %83 = vector.extract_strided_slice %82 {offsets = [0, 0], sizes = [8, 128], strides = [1, 1]} : vector<8x384xbf16> to vector<8x128xbf16>
    %84 = vector.extract_strided_slice %82 {offsets = [0, 128], sizes = [8, 128], strides = [1, 1]} : vector<8x384xbf16> to vector<8x128xbf16>
    %85 = vector.extract_strided_slice %82 {offsets = [0, 256], sizes = [8, 128], strides = [1, 1]} : vector<8x384xbf16> to vector<8x128xbf16>
    %86 = vector.extract_strided_slice %74 {offsets = [0, 384], sizes = [8, 128], strides = [1, 1]} : vector<8x512xbf16> to vector<8x128xbf16>
    %87 = math.tanh %86 : vector<8x128xbf16>
    %88 = arith.extf %84 : vector<8x128xbf16> to vector<8x128xf32>
    %89 = arith.mulf %88, %65 : vector<8x128xf32>
    %90 = arith.mulf %83, %87 : vector<8x128xbf16>
    %91 = arith.extf %90 : vector<8x128xbf16> to vector<8x128xf32>
    %92 = arith.addf %89, %91 : vector<8x128xf32>
    %93 = arith.truncf %92 : vector<8x128xf32> to vector<8x128xbf16>
    %94 = math.tanh %93 : vector<8x128xbf16>
    %95 = arith.mulf %85, %94 : vector<8x128xbf16>
    %96 = arith.extf %95 : vector<8x128xbf16> to vector<8x128xf32>
    %c16_35 = arith.constant 16 : index
    %c0_36 = arith.constant 0 : index
    %97 = vector.load %arg9[%c16_35, %c0_36] : memref<64x128xf32, #tpu.memory_space<vmem>>, vector<8x128xf32>
    tpu.vector_store %arg9[%c16_35, %c0_36], %96 {strides = array<i32>} : memref<64x128xf32, #tpu.memory_space<vmem>>, vector<8x128xf32>,
    %c24 = arith.constant 24 : index
    %c0_37 = arith.constant 0 : index
    %98 = vector.load %arg8[%c24, %c0_37] : memref<64x512xf32, #tpu.memory_space<vmem>>, vector<8x512xf32>
    %cst_38 = arith.constant dense<0.000000e+00> : vector<8x512xf32>
    %99 = tpu.matmul %95, %14, %cst_38 {dimension_numbers = #tpu.dot_dimension_numbers<[1], [0], [0], [1], [0, 0, 1, 1], [], []>} : vector<8x128xbf16>, vector<128x512xbf16>, vector<8x512xf32> -> vector<8x512xf32>
    %100 = arith.addf %98, %99 : vector<8x512xf32>
    %101 = arith.truncf %100 : vector<8x512xf32> to vector<8x512xbf16>
    %102 = vector.extract_strided_slice %101 {offsets = [0, 0], sizes = [8, 384], strides = [1, 1]} : vector<8x512xbf16> to vector<8x384xbf16>
    %cst_39 = arith.constant 5.000000e-01 : bf16
    %103 = vector.broadcast %cst_39 : bf16 to vector<8x384xbf16>
    %104 = arith.mulf %103, %102 : vector<8x384xbf16>
    %105 = math.tanh %104 : vector<8x384xbf16>
    %cst_40 = arith.constant 1.000000e+00 : bf16
    %106 = vector.broadcast %cst_40 : bf16 to vector<8x384xbf16>
    %107 = arith.addf %105, %106 : vector<8x384xbf16>
    %cst_41 = arith.constant 5.000000e-01 : bf16
    %108 = vector.broadcast %cst_41 : bf16 to vector<8x384xbf16>
    %109 = arith.mulf %108, %107 : vector<8x384xbf16>
    %110 = vector.extract_strided_slice %109 {offsets = [0, 0], sizes = [8, 128], strides = [1, 1]} : vector<8x384xbf16> to vector<8x128xbf16>
    %111 = vector.extract_strided_slice %109 {offsets = [0, 128], sizes = [8, 128], strides = [1, 1]} : vector<8x384xbf16> to vector<8x128xbf16>
    %112 = vector.extract_strided_slice %109 {offsets = [0, 256], sizes = [8, 128], strides = [1, 1]} : vector<8x384xbf16> to vector<8x128xbf16>
    %113 = vector.extract_strided_slice %101 {offsets = [0, 384], sizes = [8, 128], strides = [1, 1]} : vector<8x512xbf16> to vector<8x128xbf16>
    %114 = math.tanh %113 : vector<8x128xbf16>
    %115 = arith.extf %111 : vector<8x128xbf16> to vector<8x128xf32>
    %116 = arith.mulf %115, %92 : vector<8x128xf32>
    %117 = arith.mulf %110, %114 : vector<8x128xbf16>
    %118 = arith.extf %117 : vector<8x128xbf16> to vector<8x128xf32>
    %119 = arith.addf %116, %118 : vector<8x128xf32>
    %120 = arith.truncf %119 : vector<8x128xf32> to vector<8x128xbf16>
    %121 = math.tanh %120 : vector<8x128xbf16>
    %122 = arith.mulf %112, %121 : vector<8x128xbf16>
    %123 = arith.extf %122 : vector<8x128xbf16> to vector<8x128xf32>
    %c24_42 = arith.constant 24 : index
    %c0_43 = arith.constant 0 : index
    %124 = vector.load %arg9[%c24_42, %c0_43] : memref<64x128xf32, #tpu.memory_space<vmem>>, vector<8x128xf32>
    tpu.vector_store %arg9[%c24_42, %c0_43], %123 {strides = array<i32>} : memref<64x128xf32, #tpu.memory_space<vmem>>, vector<8x128xf32>,
    %c32 = arith.constant 32 : index
    %c0_44 = arith.constant 0 : index
    %125 = vector.load %arg8[%c32, %c0_44] : memref<64x512xf32, #tpu.memory_space<vmem>>, vector<8x512xf32>
    %cst_45 = arith.constant dense<0.000000e+00> : vector<8x512xf32>
    %126 = tpu.matmul %122, %14, %cst_45 {dimension_numbers = #tpu.dot_dimension_numbers<[1], [0], [0], [1], [0, 0, 1, 1], [], []>} : vector<8x128xbf16>, vector<128x512xbf16>, vector<8x512xf32> -> vector<8x512xf32>
    %127 = arith.addf %125, %126 : vector<8x512xf32>
    %128 = arith.truncf %127 : vector<8x512xf32> to vector<8x512xbf16>
    %129 = vector.extract_strided_slice %128 {offsets = [0, 0], sizes = [8, 384], strides = [1, 1]} : vector<8x512xbf16> to vector<8x384xbf16>
    %cst_46 = arith.constant 5.000000e-01 : bf16
    %130 = vector.broadcast %cst_46 : bf16 to vector<8x384xbf16>
    %131 = arith.mulf %130, %129 : vector<8x384xbf16>
    %132 = math.tanh %131 : vector<8x384xbf16>
    %cst_47 = arith.constant 1.000000e+00 : bf16
    %133 = vector.broadcast %cst_47 : bf16 to vector<8x384xbf16>
    %134 = arith.addf %132, %133 : vector<8x384xbf16>
    %cst_48 = arith.constant 5.000000e-01 : bf16
    %135 = vector.broadcast %cst_48 : bf16 to vector<8x384xbf16>
    %136 = arith.mulf %135, %134 : vector<8x384xbf16>
    %137 = vector.extract_strided_slice %136 {offsets = [0, 0], sizes = [8, 128], strides = [1, 1]} : vector<8x384xbf16> to vector<8x128xbf16>
    %138 = vector.extract_strided_slice %136 {offsets = [0, 128], sizes = [8, 128], strides = [1, 1]} : vector<8x384xbf16> to vector<8x128xbf16>
    %139 = vector.extract_strided_slice %136 {offsets = [0, 256], sizes = [8, 128], strides = [1, 1]} : vector<8x384xbf16> to vector<8x128xbf16>
    %140 = vector.extract_strided_slice %128 {offsets = [0, 384], sizes = [8, 128], strides = [1, 1]} : vector<8x512xbf16> to vector<8x128xbf16>
    %141 = math.tanh %140 : vector<8x128xbf16>
    %142 = arith.extf %138 : vector<8x128xbf16> to vector<8x128xf32>
    %143 = arith.mulf %142, %119 : vector<8x128xf32>
    %144 = arith.mulf %137, %141 : vector<8x128xbf16>
    %145 = arith.extf %144 : vector<8x128xbf16> to vector<8x128xf32>
    %146 = arith.addf %143, %145 : vector<8x128xf32>
    %147 = arith.truncf %146 : vector<8x128xf32> to vector<8x128xbf16>
    %148 = math.tanh %147 : vector<8x128xbf16>
    %149 = arith.mulf %139, %148 : vector<8x128xbf16>
    %150 = arith.extf %149 : vector<8x128xbf16> to vector<8x128xf32>
    %c32_49 = arith.constant 32 : index
    %c0_50 = arith.constant 0 : index
    %151 = vector.load %arg9[%c32_49, %c0_50] : memref<64x128xf32, #tpu.memory_space<vmem>>, vector<8x128xf32>
    tpu.vector_store %arg9[%c32_49, %c0_50], %150 {strides = array<i32>} : memref<64x128xf32, #tpu.memory_space<vmem>>, vector<8x128xf32>,
    %c40 = arith.constant 40 : index
    %c0_51 = arith.constant 0 : index
    %152 = vector.load %arg8[%c40, %c0_51] : memref<64x512xf32, #tpu.memory_space<vmem>>, vector<8x512xf32>
    %cst_52 = arith.constant dense<0.000000e+00> : vector<8x512xf32>
    %153 = tpu.matmul %149, %14, %cst_52 {dimension_numbers = #tpu.dot_dimension_numbers<[1], [0], [0], [1], [0, 0, 1, 1], [], []>} : vector<8x128xbf16>, vector<128x512xbf16>, vector<8x512xf32> -> vector<8x512xf32>
    %154 = arith.addf %152, %153 : vector<8x512xf32>
    %155 = arith.truncf %154 : vector<8x512xf32> to vector<8x512xbf16>
    %156 = vector.extract_strided_slice %155 {offsets = [0, 0], sizes = [8, 384], strides = [1, 1]} : vector<8x512xbf16> to vector<8x384xbf16>
    %cst_53 = arith.constant 5.000000e-01 : bf16
    %157 = vector.broadcast %cst_53 : bf16 to vector<8x384xbf16>
    %158 = arith.mulf %157, %156 : vector<8x384xbf16>
    %159 = math.tanh %158 : vector<8x384xbf16>
    %cst_54 = arith.constant 1.000000e+00 : bf16
    %160 = vector.broadcast %cst_54 : bf16 to vector<8x384xbf16>
    %161 = arith.addf %159, %160 : vector<8x384xbf16>
    %cst_55 = arith.constant 5.000000e-01 : bf16
    %162 = vector.broadcast %cst_55 : bf16 to vector<8x384xbf16>
    %163 = arith.mulf %162, %161 : vector<8x384xbf16>
    %164 = vector.extract_strided_slice %163 {offsets = [0, 0], sizes = [8, 128], strides = [1, 1]} : vector<8x384xbf16> to vector<8x128xbf16>
    %165 = vector.extract_strided_slice %163 {offsets = [0, 128], sizes = [8, 128], strides = [1, 1]} : vector<8x384xbf16> to vector<8x128xbf16>
    %166 = vector.extract_strided_slice %163 {offsets = [0, 256], sizes = [8, 128], strides = [1, 1]} : vector<8x384xbf16> to vector<8x128xbf16>
    %167 = vector.extract_strided_slice %155 {offsets = [0, 384], sizes = [8, 128], strides = [1, 1]} : vector<8x512xbf16> to vector<8x128xbf16>
    %168 = math.tanh %167 : vector<8x128xbf16>
    %169 = arith.extf %165 : vector<8x128xbf16> to vector<8x128xf32>
    %170 = arith.mulf %169, %146 : vector<8x128xf32>
    %171 = arith.mulf %164, %168 : vector<8x128xbf16>
    %172 = arith.extf %171 : vector<8x128xbf16> to vector<8x128xf32>
    %173 = arith.addf %170, %172 : vector<8x128xf32>
    %174 = arith.truncf %173 : vector<8x128xf32> to vector<8x128xbf16>
    %175 = math.tanh %174 : vector<8x128xbf16>
    %176 = arith.mulf %166, %175 : vector<8x128xbf16>
    %177 = arith.extf %176 : vector<8x128xbf16> to vector<8x128xf32>
    %c40_56 = arith.constant 40 : index
    %c0_57 = arith.constant 0 : index
    %178 = vector.load %arg9[%c40_56, %c0_57] : memref<64x128xf32, #tpu.memory_space<vmem>>, vector<8x128xf32>
    tpu.vector_store %arg9[%c40_56, %c0_57], %177 {strides = array<i32>} : memref<64x128xf32, #tpu.memory_space<vmem>>, vector<8x128xf32>,
    %c48 = arith.constant 48 : index
    %c0_58 = arith.constant 0 : index
    %179 = vector.load %arg8[%c48, %c0_58] : memref<64x512xf32, #tpu.memory_space<vmem>>, vector<8x512xf32>
    %cst_59 = arith.constant dense<0.000000e+00> : vector<8x512xf32>
    %180 = tpu.matmul %176, %14, %cst_59 {dimension_numbers = #tpu.dot_dimension_numbers<[1], [0], [0], [1], [0, 0, 1, 1], [], []>} : vector<8x128xbf16>, vector<128x512xbf16>, vector<8x512xf32> -> vector<8x512xf32>
    %181 = arith.addf %179, %180 : vector<8x512xf32>
    %182 = arith.truncf %181 : vector<8x512xf32> to vector<8x512xbf16>
    %183 = vector.extract_strided_slice %182 {offsets = [0, 0], sizes = [8, 384], strides = [1, 1]} : vector<8x512xbf16> to vector<8x384xbf16>
    %cst_60 = arith.constant 5.000000e-01 : bf16
    %184 = vector.broadcast %cst_60 : bf16 to vector<8x384xbf16>
    %185 = arith.mulf %184, %183 : vector<8x384xbf16>
    %186 = math.tanh %185 : vector<8x384xbf16>
    %cst_61 = arith.constant 1.000000e+00 : bf16
    %187 = vector.broadcast %cst_61 : bf16 to vector<8x384xbf16>
    %188 = arith.addf %186, %187 : vector<8x384xbf16>
    %cst_62 = arith.constant 5.000000e-01 : bf16
    %189 = vector.broadcast %cst_62 : bf16 to vector<8x384xbf16>
    %190 = arith.mulf %189, %188 : vector<8x384xbf16>
    %191 = vector.extract_strided_slice %190 {offsets = [0, 0], sizes = [8, 128], strides = [1, 1]} : vector<8x384xbf16> to vector<8x128xbf16>
    %192 = vector.extract_strided_slice %190 {offsets = [0, 128], sizes = [8, 128], strides = [1, 1]} : vector<8x384xbf16> to vector<8x128xbf16>
    %193 = vector.extract_strided_slice %190 {offsets = [0, 256], sizes = [8, 128], strides = [1, 1]} : vector<8x384xbf16> to vector<8x128xbf16>
    %194 = vector.extract_strided_slice %182 {offsets = [0, 384], sizes = [8, 128], strides = [1, 1]} : vector<8x512xbf16> to vector<8x128xbf16>
    %195 = math.tanh %194 : vector<8x128xbf16>
    %196 = arith.extf %192 : vector<8x128xbf16> to vector<8x128xf32>
    %197 = arith.mulf %196, %173 : vector<8x128xf32>
    %198 = arith.mulf %191, %195 : vector<8x128xbf16>
    %199 = arith.extf %198 : vector<8x128xbf16> to vector<8x128xf32>
    %200 = arith.addf %197, %199 : vector<8x128xf32>
    %201 = arith.truncf %200 : vector<8x128xf32> to vector<8x128xbf16>
    %202 = math.tanh %201 : vector<8x128xbf16>
    %203 = arith.mulf %193, %202 : vector<8x128xbf16>
    %204 = arith.extf %203 : vector<8x128xbf16> to vector<8x128xf32>
    %c48_63 = arith.constant 48 : index
    %c0_64 = arith.constant 0 : index
    %205 = vector.load %arg9[%c48_63, %c0_64] : memref<64x128xf32, #tpu.memory_space<vmem>>, vector<8x128xf32>
    tpu.vector_store %arg9[%c48_63, %c0_64], %204 {strides = array<i32>} : memref<64x128xf32, #tpu.memory_space<vmem>>, vector<8x128xf32>,
    %c56 = arith.constant 56 : index
    %c0_65 = arith.constant 0 : index
    %206 = vector.load %arg8[%c56, %c0_65] : memref<64x512xf32, #tpu.memory_space<vmem>>, vector<8x512xf32>
    %cst_66 = arith.constant dense<0.000000e+00> : vector<8x512xf32>
    %207 = tpu.matmul %203, %14, %cst_66 {dimension_numbers = #tpu.dot_dimension_numbers<[1], [0], [0], [1], [0, 0, 1, 1], [], []>} : vector<8x128xbf16>, vector<128x512xbf16>, vector<8x512xf32> -> vector<8x512xf32>
    %208 = arith.addf %206, %207 : vector<8x512xf32>
    %209 = arith.truncf %208 : vector<8x512xf32> to vector<8x512xbf16>
    %210 = vector.extract_strided_slice %209 {offsets = [0, 0], sizes = [8, 384], strides = [1, 1]} : vector<8x512xbf16> to vector<8x384xbf16>
    %cst_67 = arith.constant 5.000000e-01 : bf16
    %211 = vector.broadcast %cst_67 : bf16 to vector<8x384xbf16>
    %212 = arith.mulf %211, %210 : vector<8x384xbf16>
    %213 = math.tanh %212 : vector<8x384xbf16>
    %cst_68 = arith.constant 1.000000e+00 : bf16
    %214 = vector.broadcast %cst_68 : bf16 to vector<8x384xbf16>
    %215 = arith.addf %213, %214 : vector<8x384xbf16>
    %cst_69 = arith.constant 5.000000e-01 : bf16
    %216 = vector.broadcast %cst_69 : bf16 to vector<8x384xbf16>
    %217 = arith.mulf %216, %215 : vector<8x384xbf16>
    %218 = vector.extract_strided_slice %217 {offsets = [0, 0], sizes = [8, 128], strides = [1, 1]} : vector<8x384xbf16> to vector<8x128xbf16>
    %219 = vector.extract_strided_slice %217 {offsets = [0, 128], sizes = [8, 128], strides = [1, 1]} : vector<8x384xbf16> to vector<8x128xbf16>
    %220 = vector.extract_strided_slice %217 {offsets = [0, 256], sizes = [8, 128], strides = [1, 1]} : vector<8x384xbf16> to vector<8x128xbf16>
    %221 = vector.extract_strided_slice %209 {offsets = [0, 384], sizes = [8, 128], strides = [1, 1]} : vector<8x512xbf16> to vector<8x128xbf16>
    %222 = math.tanh %221 : vector<8x128xbf16>
    %223 = arith.extf %219 : vector<8x128xbf16> to vector<8x128xf32>
    %224 = arith.mulf %223, %200 : vector<8x128xf32>
    %225 = arith.mulf %218, %222 : vector<8x128xbf16>
    %226 = arith.extf %225 : vector<8x128xbf16> to vector<8x128xf32>
    %227 = arith.addf %224, %226 : vector<8x128xf32>
    %228 = arith.truncf %227 : vector<8x128xf32> to vector<8x128xbf16>
    %229 = math.tanh %228 : vector<8x128xbf16>
    %230 = arith.mulf %220, %229 : vector<8x128xbf16>
    %231 = arith.extf %230 : vector<8x128xbf16> to vector<8x128xf32>
    %c56_70 = arith.constant 56 : index
    %c0_71 = arith.constant 0 : index
    %232 = vector.load %arg9[%c56_70, %c0_71] : memref<64x128xf32, #tpu.memory_space<vmem>>, vector<8x128xf32>
    tpu.vector_store %arg9[%c56_70, %c0_71], %231 {strides = array<i32>} : memref<64x128xf32, #tpu.memory_space<vmem>>, vector<8x128xf32>,
    %c3_i32 = arith.constant 3 : i32
    %233 = arith.cmpi eq, %arg0, %c3_i32 : i32
    %234 = arith.extui %233 : i1 to i32
    %c0_i32_72 = arith.constant 0 : i32
    %235 = arith.cmpi ne, %234, %c0_i32_72 : i32
    scf.if %235 {
      %c0_73 = arith.constant 0 : index
      %c0_74 = arith.constant 0 : index
      %236 = vector.load %arg5[%c0_73, %c0_74] : memref<128x1xbf16, #tpu.memory_space<vmem>>, vector<128x1xbf16>
      %cst_75 = arith.constant dense<0.000000e+00> : vector<8x1xf32>
      %237 = tpu.matmul %230, %236, %cst_75 {dimension_numbers = #tpu.dot_dimension_numbers<[1], [0], [0], [1], [0, 0, 1, 1], [], []>} : vector<8x128xbf16>, vector<128x1xbf16>, vector<8x1xf32> -> vector<8x1xf32>
      %c0_76 = arith.constant 0 : index
      %c0_77 = arith.constant 0 : index
      %238 = vector.load %arg6[%c0_76, %c0_77] : memref<1x1xf32, #tpu.memory_space<vmem>>, vector<1x1xf32>
      %239 = vector.broadcast %238 : vector<1x1xf32> to vector<8x1xf32>
      %240 = arith.addf %237, %239 : vector<8x1xf32>
      %c0_78 = arith.constant 0 : index
      %c0_79 = arith.constant 0 : index
      %241 = vector.load %arg7[%c0_78, %c0_79] : memref<8x1xf32, #tpu.memory_space<vmem>>, vector<8x1xf32>
      tpu.vector_store %arg7[%c0_78, %c0_79], %240 {strides = array<i32>} : memref<8x1xf32, #tpu.memory_space<vmem>>, vector<8x1xf32>,
    } else {
    }
    return
  }
  func.func @transform_0(%arg0: i32) -> (i32, i32) {
    %c0_i32 = arith.constant 0 : i32
    %c0_i32_0 = arith.constant 0 : i32
    %c0_i32_1 = arith.constant 0 : i32
    return %c0_i32, %c0_i32_0 : i32, i32
  }
  func.func @transform_1(%arg0: i32) -> (i32, i32, i32) {
    %c0_i32 = arith.constant 0 : i32
    %c0_i32_0 = arith.constant 0 : i32
    %c0_i32_1 = arith.constant 0 : i32
    return %arg0, %c0_i32, %c0_i32_0 : i32, i32, i32
  }
  func.func @transform_2(%arg0: i32) -> (i32, i32, i32) {
    %c0_i32 = arith.constant 0 : i32
    %c0_i32_0 = arith.constant 0 : i32
    %c0_i32_1 = arith.constant 0 : i32
    return %arg0, %c0_i32, %c0_i32_0 : i32, i32, i32
  }
  func.func @transform_3(%arg0: i32) -> (i32, i32, i32) {
    %c0_i32 = arith.constant 0 : i32
    %c0_i32_0 = arith.constant 0 : i32
    %c0_i32_1 = arith.constant 0 : i32
    return %arg0, %c0_i32, %c0_i32_0 : i32, i32, i32
  }
  func.func @transform_4(%arg0: i32) -> (i32, i32) {
    %c0_i32 = arith.constant 0 : i32
    %c0_i32_0 = arith.constant 0 : i32
    %c0_i32_1 = arith.constant 0 : i32
    return %c0_i32, %c0_i32_0 : i32, i32
  }
  func.func @transform_5(%arg0: i32) -> (i32, i32) {
    %c0_i32 = arith.constant 0 : i32
    %c0_i32_0 = arith.constant 0 : i32
    %c0_i32_1 = arith.constant 0 : i32
    return %c0_i32, %c0_i32_0 : i32, i32
  }
  func.func @transform_6(%arg0: i32) -> (i32, i32) {
    %c0_i32 = arith.constant 0 : i32
    %c0_i32_0 = arith.constant 0 : i32
    %c0_i32_1 = arith.constant 0 : i32
    return %c0_i32, %c0_i32_0 : i32, i32
  }
}

</mosaic_0001>

<llo_original>
// kernel: lstm_forward.1
$region0: #{lstm_forward.1}
  #allocation0 [shape = 'u32[]', space=smem, size = 0x4, offset = 0x4, fixed_abs, tag = 'smem constant byte address 0x4 - core index']
  #allocation1 [shape = 'u32[144,128]{1,0:T(1,128)}', space=vmem, size = 0x12000, scoped, tag = 'internal scratch']
  #allocation2 [shape = 'f32[64,512]{1,0:T(8,128)}', space=vmem, size = 0x20000, scoped, tag = 'scratch operand']
  #allocation3 [shape = 'f32[64,128]{1,0:T(8,128)}', space=vmem, size = 0x8000, scoped, tag = 'scratch operand']
  #allocation4 [shape = 'f32[1,1]{1,0:T(1,128)S(1)}', space=vmem, size = 0x200, scoped, tag = 'scoped memory for lstm_forward.1']
  %s0 = inlined_call_operand.vmem [shape: bf16[64,128], index: 0, kind: input, shape index: {}]
  %s1 = inlined_call_operand.vmem [shape: bf16[4,128,512], index: 1, kind: input, shape index: {}]
  %s2 = inlined_call_operand.vmem [shape: bf16[4,128,512], index: 2, kind: input, shape index: {}]
  %s3 = inlined_call_operand.vmem [shape: f32[4,1,512], index: 3, kind: input, shape index: {}]
  %s4 = inlined_call_operand.vmem [shape: bf16[128,1], index: 4, kind: input, shape index: {}]
  %s5 = inlined_call_operand.<no memory space> [shape: f32[1,1], index: 5, kind: input, shape index: {}]
  %s6 = inlined_call_operand.vmem [shape: f32[8,1], index: 6, kind: output, shape index: {}]
  %s7 = sld [smem:[#allocation0]]
  $region65: #{lstm_forward.1} parent=0
    _
  %s9 = ssub.s32 1, %s7
  %s10 = scalar_select 0, %s9, %s7
  %v11 = vstv %s5
  %12 = vst [vmem:[#allocation4] sm:$0x1] %v11
  loop: start=0, step=1, limit=6
  $region2: #{lstm_forward.1} parent=0 // loop_pre_header
    _
  $region3: #{lstm_forward.1} parent=0 // loop_header
    %s14 = sphi 0, %s18
    %p15 = scmp.ge.s32.totalorder %s14, 6
    %s22 = sphi 0, %s22
    %s24 = sphi 0, %s22
    %s25 = sphi 0, %s24
    %s39 = sphi 0, %s25
    %s45 = sphi 0, %s47
    %s48 = sphi 0, %s45
    %s49 = sphi 0, %s48
    %s65 = sphi 0, %s49
    %s71 = sphi 0, %s73
    %s74 = sphi 0, %s71
    %s75 = sphi 0, %s74
    %s91 = sphi 0, %s75
    %s97 = sphi 0, %s99
    %s100 = sphi 0, %s97
    %s101 = sphi 0, %s100
    %s117 = sphi 0, %s101
    %s121 = sphi 0, %s121
    %s123 = sphi 0, %s121
    %s124 = sphi 0, %s123
    %s138 = sphi 0, %s124
    %s142 = sphi 0, %s142
    %s144 = sphi 0, %s142
    %s145 = sphi 0, %s144
    %s159 = sphi 0, %s145
    %s163 = sphi 0, %s163
    %s165 = sphi 0, %s163
    %s166 = sphi 0, %s165
    %s180 = sphi 0, %s166
  $region4: #{lstm_forward.1} parent=0 // loop_header_branch
    %17 = sbr.rel (%p15) target = $region8
  $region5: #{lstm_forward.1} parent=0 // loop_body
    %s19 = ssub.s32 %s14, 1
    %s20 = ssub.s32 %s14, 2
    %s21 = sadd.s32 %s14, 1
    %s23 = sadd.s32 %s22, 1
    %p26 = scmp.eq.s32.totalorder %s14, 3
    %p27 = scmp.ne.s32.totalorder %s22, %s24
    %p28 = scmp.eq.s32.totalorder %s14, 0
    %p29 = por %p27, %p28
    %p30 = scmp.ne.s32.totalorder %s22, %s24
    %p31 = scmp.eq.s32.totalorder %s19, 3
    %p32 = por %p30, %p31
    %p33 = scmp.ne.s32.totalorder %s24, %s25
    %p34 = scmp.eq.s32.totalorder %s19, 0
    %p35 = por %p33, %p34
    %p36 = scmp.ne.s32.totalorder %s24, %s25
    %p37 = scmp.eq.s32.totalorder %s20, 3
    %p38 = por %p36, %p37
    %p40 = scmp.ne.s32.totalorder %s25, %s39
    %p41 = scmp.eq.s32.totalorder %s20, 0
    %p42 = por %p40, %p41
    %s43 = ssub.s32 %s14, %s21
    %p44 = scmp.eq.s32.totalorder %s43, 0
    %s46 = sadd.s32 %s45, 1
    %s47 = scalar_select %p44, %s45, %s46
    %p50 = pneg %p44
    %p51 = scmp.eq.s32.totalorder %s14, 3
    %p52 = por %p50, %p51
    %p53 = scmp.ne.s32.totalorder %s45, %s48
    %p54 = scmp.eq.s32.totalorder %s14, 0
    %p55 = por %p53, %p54
    %p56 = scmp.ne.s32.totalorder %s45, %s48
    %p57 = scmp.eq.s32.totalorder %s19, 3
    %p58 = por %p56, %p57
    %p59 = scmp.ne.s32.totalorder %s48, %s49
    %p60 = scmp.eq.s32.totalorder %s19, 0
    %p61 = por %p59, %p60
    %p62 = scmp.ne.s32.totalorder %s48, %s49
    %p63 = scmp.eq.s32.totalorder %s20, 3
    %p64 = por %p62, %p63
    %p66 = scmp.ne.s32.totalorder %s49, %s65
    %p67 = scmp.eq.s32.totalorder %s20, 0
    %p68 = por %p66, %p67
    %s69 = ssub.s32 %s14, %s21
    %p70 = scmp.eq.s32.totalorder %s69, 0
    %s72 = sadd.s32 %s71, 1
    %s73 = scalar_select %p70, %s71, %s72
    %p76 = pneg %p70
    %p77 = scmp.eq.s32.totalorder %s14, 3
    %p78 = por %p76, %p77
    %p79 = scmp.ne.s32.totalorder %s71, %s74
    %p80 = scmp.eq.s32.totalorder %s14, 0
    %p81 = por %p79, %p80
    %p82 = scmp.ne.s32.totalorder %s71, %s74
    %p83 = scmp.eq.s32.totalorder %s19, 3
    %p84 = por %p82, %p83
    %p85 = scmp.ne.s32.totalorder %s74, %s75
    %p86 = scmp.eq.s32.totalorder %s19, 0
    %p87 = por %p85, %p86
    %p88 = scmp.ne.s32.totalorder %s74, %s75
    %p89 = scmp.eq.s32.totalorder %s20, 3
    %p90 = por %p88, %p89
    %p92 = scmp.ne.s32.totalorder %s75, %s91
    %p93 = scmp.eq.s32.totalorder %s20, 0
    %p94 = por %p92, %p93
    %s95 = ssub.s32 %s14, %s21
    %p96 = scmp.eq.s32.totalorder %s95, 0
    %s98 = sadd.s32 %s97, 1
    %s99 = scalar_select %p96, %s97, %s98
    %p102 = pneg %p96
    %p103 = scmp.eq.s32.totalorder %s14, 3
    %p104 = por %p102, %p103
    %p105 = scmp.ne.s32.totalorder %s97, %s100
    %p106 = scmp.eq.s32.totalorder %s14, 0
    %p107 = por %p105, %p106
    %p108 = scmp.ne.s32.totalorder %s97, %s100
    %p109 = scmp.eq.s32.totalorder %s19, 3
    %p110 = por %p108, %p109
    %p111 = scmp.ne.s32.totalorder %s100, %s101
    %p112 = scmp.eq.s32.totalorder %s19, 0
    %p113 = por %p111, %p112
    %p114 = scmp.ne.s32.totalorder %s100, %s101
    %p115 = scmp.eq.s32.totalorder %s20, 3
    %p116 = por %p114, %p115
    %p118 = scmp.ne.s32.totalorder %s101, %s117
    %p119 = scmp.eq.s32.totalorder %s20, 0
    %p120 = por %p118, %p119
    %s122 = sadd.s32 %s121, 1
    %p125 = scmp.eq.s32.totalorder %s14, 3
    %p126 = scmp.ne.s32.totalorder %s121, %s123
    %p127 = scmp.eq.s32.totalorder %s14, 0
    %p128 = por %p126, %p127
    %p129 = scmp.ne.s32.totalorder %s121, %s123
    %p130 = scmp.eq.s32.totalorder %s19, 3
    %p131 = por %p129, %p130
    %p132 = scmp.ne.s32.totalorder %s123, %s124
    %p133 = scmp.eq.s32.totalorder %s19, 0
    %p134 = por %p132, %p133
    %p135 = scmp.ne.s32.totalorder %s123, %s124
    %p136 = scmp.eq.s32.totalorder %s20, 3
    %p137 = por %p135, %p136
    %p139 = scmp.ne.s32.totalorder %s124, %s138
    %p140 = scmp.eq.s32.totalorder %s20, 0
    %p141 = por %p139, %p140
    %s143 = sadd.s32 %s142, 1
    %p146 = scmp.eq.s32.totalorder %s14, 3
    %p147 = scmp.ne.s32.totalorder %s142, %s144
    %p148 = scmp.eq.s32.totalorder %s14, 0
    %p149 = por %p147, %p148
    %p150 = scmp.ne.s32.totalorder %s142, %s144
    %p151 = scmp.eq.s32.totalorder %s19, 3
    %p152 = por %p150, %p151
    %p153 = scmp.ne.s32.totalorder %s144, %s145
    %p154 = scmp.eq.s32.totalorder %s19, 0
    %p155 = por %p153, %p154
    %p156 = scmp.ne.s32.totalorder %s144, %s145
    %p157 = scmp.eq.s32.totalorder %s20, 3
    %p158 = por %p156, %p157
    %p160 = scmp.ne.s32.totalorder %s145, %s159
    %p161 = scmp.eq.s32.totalorder %s20, 0
    %p162 = por %p160, %p161
    %s164 = sadd.s32 %s163, 1
    %p167 = scmp.eq.s32.totalorder %s14, 3
    %p168 = scmp.ne.s32.totalorder %s163, %s165
    %p169 = scmp.eq.s32.totalorder %s14, 0
    %p170 = por %p168, %p169
    %p171 = scmp.ne.s32.totalorder %s163, %s165
    %p172 = scmp.eq.s32.totalorder %s19, 3
    %p173 = por %p171, %p172
    %p174 = scmp.ne.s32.totalorder %s165, %s166
    %p175 = scmp.eq.s32.totalorder %s19, 0
    %p176 = por %p174, %p175
    %p177 = scmp.ne.s32.totalorder %s165, %s166
    %p178 = scmp.eq.s32.totalorder %s20, 3
    %p179 = por %p177, %p178
    %p181 = scmp.ne.s32.totalorder %s166, %s180
    %p182 = scmp.eq.s32.totalorder %s20, 0
    %p183 = por %p181, %p182
    %p184 = scmp.le.s32.totalorder 1, %s14
    %p185 = scmp.lt.s32.totalorder %s14, 5
    %p186 = pnand %p184, %p185
    %p187 = pneg %p186
    // Predicated region
    $region9: #{lstm_forward.1} parent=5 // pred_check
      _
    $region10: #{lstm_forward.1} parent=5 // pred_check_branch
      %189 = sbr.rel (%p186) target = $region12
    $region11: #{lstm_forward.1} parent=5 // pred_region
      %s190 = ssub.s32 %s14, 1
      // Predicated region
      $region13: #{lstm_forward.1} parent=11 // pred_check
        %p191 = pneg %p35
      $region14: #{lstm_forward.1} parent=11 // pred_check_branch
        %193 = sbr.rel (%p191) target = $region16
      $region15: #{lstm_forward.1} parent=11 // pred_region
        _
      $region16: #{lstm_forward.1} parent=11 // pred_fallthru
        _
      // Predicated region
      $region17: #{lstm_forward.1} parent=11 // pred_check
        %p194 = pneg %p134
      $region18: #{lstm_forward.1} parent=11 // pred_check_branch
        %196 = sbr.rel (%p194) target = $region20
      $region19: #{lstm_forward.1} parent=11 // pred_region
        _
      $region20: #{lstm_forward.1} parent=11 // pred_fallthru
        _
      // Predicated region
      $region21: #{lstm_forward.1} parent=11 // pred_check
        %p197 = pneg %p155
      $region22: #{lstm_forward.1} parent=11 // pred_check_branch
        %199 = sbr.rel (%p197) target = $region24
      $region23: #{lstm_forward.1} parent=11 // pred_region
        _
      $region24: #{lstm_forward.1} parent=11 // pred_fallthru
        _
    $region12: #{lstm_forward.1} parent=5 // pred_fallthru
      _
    %p200 = scmp.lt.s32.totalorder %s14, 4
    // Predicated region
    $region25: #{lstm_forward.1} parent=5 // pred_check
      %p201 = pneg %p200
    $region26: #{lstm_forward.1} parent=5 // pred_check_branch
      %203 = sbr.rel (%p201) target = $region28
    $region27: #{lstm_forward.1} parent=5 // pred_region
      // Predicated region
      $region29: #{lstm_forward.1} parent=27 // pred_check
        %p204 = pneg %p55
      $region30: #{lstm_forward.1} parent=27 // pred_check_branch
        %206 = sbr.rel (%p204) target = $region32
      $region31: #{lstm_forward.1} parent=27 // pred_region
        %p207 = scmp.lt.s32.totalorder %s14, 3
        %s208 = scalar_select %p207, %s14, 3
        %s209 = smul.addr %s208, 64
        %s210 = smul.addr %s209, 4
        %s211 = scalar_lea.vmem %s1, %s210
      $region32: #{lstm_forward.1} parent=27 // pred_fallthru
        _
      // Predicated region
      $region33: #{lstm_forward.1} parent=27 // pred_check
        %p212 = pneg %p81
      $region34: #{lstm_forward.1} parent=27 // pred_check_branch
        %214 = sbr.rel (%p212) target = $region36
      $region35: #{lstm_forward.1} parent=27 // pred_region
        %p215 = scmp.lt.s32.totalorder %s14, 3
        %s216 = scalar_select %p215, %s14, 3
        %s217 = smul.addr %s216, 64
        %s218 = smul.addr %s217, 4
        %s219 = scalar_lea.vmem %s2, %s218
      $region36: #{lstm_forward.1} parent=27 // pred_fallthru
        _
      // Predicated region
      $region37: #{lstm_forward.1} parent=27 // pred_check
        %p220 = pneg %p107
      $region38: #{lstm_forward.1} parent=27 // pred_check_branch
        %222 = sbr.rel (%p220) target = $region40
      $region39: #{lstm_forward.1} parent=27 // pred_region
        %p223 = scmp.lt.s32.totalorder %s14, 3
        %s224 = scalar_select %p223, %s14, 3
        %s225 = smul.addr %s224, 4
        %s226 = scalar_lea.vmem %s3, %s225
      $region40: #{lstm_forward.1} parent=27 // pred_fallthru
        _
    $region28: #{lstm_forward.1} parent=5 // pred_fallthru
      _
    %p227 = scmp.le.s32.totalorder 1, %s14
    %p228 = scmp.lt.s32.totalorder %s14, 5
    %p229 = pnand %p227, %p228
    %p230 = pneg %p229
    // Predicated region
    $region41: #{lstm_forward.1} parent=5 // pred_check
      _
    $region42: #{lstm_forward.1} parent=5 // pred_check_branch
      %232 = sbr.rel (%p229) target = $region44
    $region43: #{lstm_forward.1} parent=5 // pred_region
      %s233 = ssub.s32 %s14, 1
      %p234 = pneg %p35
      %p235 = pneg %p32
      %p236 = scmp.lt.s32.totalorder %s19, 3
      %s237 = scalar_select %p236, %s19, 3
      %s238 = smul.addr %s237, 64
      %s239 = smul.addr %s238, 4
      %s240 = scalar_lea.vmem %s1, %s239
      %p241 = pneg %p61
      %p242 = pneg %p58
      %p243 = scmp.lt.s32.totalorder %s19, 3
      %s244 = scalar_select %p243, %s19, 3
      %s245 = smul.addr %s244, 64
      %s246 = smul.addr %s245, 4
      %s247 = scalar_lea.vmem %s2, %s246
      %p248 = pneg %p87
      %p249 = pneg %p84
      %p250 = scmp.lt.s32.totalorder %s19, 3
      %s251 = scalar_select %p250, %s19, 3
      %s252 = smul.addr %s251, 4
      %s253 = scalar_lea.vmem %s3, %s252
      %p254 = pneg %p113
      %p255 = pneg %p110
      %p256 = pneg %p134
      %p257 = pneg %p131
      %p258 = pneg %p155
      %p259 = pneg %p152
      %p260 = pneg %p176
      %p261 = pneg %p173
      %p262 = scmp.lt.s32.totalorder %s19, 3
      %s263 = scalar_select %p262, %s19, 3
      %s264 = smul.addr %s263, 64
      %s265 = smul.addr %s264, 4
      %s266 = scalar_lea.vmem %s1, %s265
      %p267 = scmp.lt.s32.totalorder %s19, 3
      %s268 = scalar_select %p267, %s19, 3
      %s269 = smul.addr %s268, 64
      %s270 = smul.addr %s269, 4
      %s271 = scalar_lea.vmem %s2, %s270
      %p272 = scmp.lt.s32.totalorder %s19, 3
      %s273 = scalar_select %p272, %s19, 3
      %s274 = smul.addr %s273, 4
      %s275 = scalar_lea.vmem %s3, %s274
      %p279 = scmp.eq.s32.totalorder %s19, 0
      // Predicated region
      $region45: #{lstm_forward.1} parent=43 // pred_check
        %p280 = pneg %p279
      $region46: #{lstm_forward.1} parent=43 // pred_check_branch
        %282 = sbr.rel (%p280) target = $region48
      $region47: #{lstm_forward.1} parent=43 // pred_region
        %v283 = vld [vmem:[%s0] sm:$0xf]
        %v284 = vld [vmem:[%s0 + $0x4] sm:$0xf]
        %v285 = vld [vmem:[%s0 + $0x8] sm:$0xf]
        %v286 = vld [vmem:[%s0 + $0xc] sm:$0xf]
        %v287 = vld [vmem:[%s0 + $0x10] sm:$0xf]
        %v288 = vld [vmem:[%s0 + $0x14] sm:$0xf]
        %v289 = vld [vmem:[%s0 + $0x18] sm:$0xf]
        %v290 = vld [vmem:[%s0 + $0x1c] sm:$0xf]
        %v291 = vunpack.c.l.bf16 %v283
        %v292 = vunpack.c.l.bf16 %v284
        %v293 = vunpack.c.l.bf16 %v285
        %v294 = vunpack.c.l.bf16 %v286
        %v295 = vunpack.c.l.bf16 %v287
        %v296 = vunpack.c.l.bf16 %v288
        %v297 = vunpack.c.l.bf16 %v289
        %v298 = vunpack.c.l.bf16 %v290
        %299 = vst [vmem:[#allocation3] sm:$0xff] %v291
        %300 = vst [vmem:[#allocation3 + $0x8] sm:$0xff] %v292
        %301 = vst [vmem:[#allocation3 + $0x10] sm:$0xff] %v293
        %302 = vst [vmem:[#allocation3 + $0x18] sm:$0xff] %v294
        %303 = vst [vmem:[#allocation3 + $0x20] sm:$0xff] %v295
        %304 = vst [vmem:[#allocation3 + $0x28] sm:$0xff] %v296
        %305 = vst [vmem:[#allocation3 + $0x30] sm:$0xff] %v297
        %306 = vst [vmem:[#allocation3 + $0x38] sm:$0xff] %v298
      $region48: #{lstm_forward.1} parent=43 // pred_fallthru
        _
      %v307 = vld [vmem:[#allocation3] sm:$0xff]
      %v308 = vld [vmem:[#allocation3 + $0x8] sm:$0xff]
      %v309 = vld [vmem:[#allocation3 + $0x10] sm:$0xff]
      %v310 = vld [vmem:[#allocation3 + $0x18] sm:$0xff]
      %v311 = vld [vmem:[#allocation3 + $0x20] sm:$0xff]
      %v312 = vld [vmem:[#allocation3 + $0x28] sm:$0xff]
      %v313 = vld [vmem:[#allocation3 + $0x30] sm:$0xff]
      %v314 = vld [vmem:[#allocation3 + $0x38] sm:$0xff]
      %v315 = vpack.c.bf16 %v308, %v307
      %v316 = vpack.c.bf16 %v310, %v309
      %v317 = vpack.c.bf16 %v312, %v311
      %v318 = vpack.c.bf16 %v314, %v313
      %v319 = vld [vmem:[%s266] sm:$0xff]
      %v320 = vld [vmem:[%s266 + $0x8] sm:$0xff]
      %v321 = vld [vmem:[%s266 + $0x10] sm:$0xff]
      %v322 = vld [vmem:[%s266 + $0x18] sm:$0xff]
      %v323 = vld [vmem:[%s266 + $0x20] sm:$0xff]
      %v324 = vld [vmem:[%s266 + $0x28] sm:$0xff]
      %v325 = vld [vmem:[%s266 + $0x30] sm:$0xff]
      %v326 = vld [vmem:[%s266 + $0x38] sm:$0xff]
      %v327 = vld [vmem:[%s266 + $0x40] sm:$0xff]
      %v328 = vld [vmem:[%s266 + $0x48] sm:$0xff]
      %v329 = vld [vmem:[%s266 + $0x50] sm:$0xff]
      %v330 = vld [vmem:[%s266 + $0x58] sm:$0xff]
      %v331 = vld [vmem:[%s266 + $0x60] sm:$0xff]
      %v332 = vld [vmem:[%s266 + $0x68] sm:$0xff]
      %v333 = vld [vmem:[%s266 + $0x70] sm:$0xff]
      %v334 = vld [vmem:[%s266 + $0x78] sm:$0xff]
      %v335 = vld [vmem:[%s266 + $0x80] sm:$0xff]
      %v336 = vld [vmem:[%s266 + $0x88] sm:$0xff]
      %v337 = vld [vmem:[%s266 + $0x90] sm:$0xff]
      %v338 = vld [vmem:[%s266 + $0x98] sm:$0xff]
      %v339 = vld [vmem:[%s266 + $0xa0] sm:$0xff]
      %v340 = vld [vmem:[%s266 + $0xa8] sm:$0xff]
      %v341 = vld [vmem:[%s266 + $0xb0] sm:$0xff]
      %v342 = vld [vmem:[%s266 + $0xb8] sm:$0xff]
      %v343 = vld [vmem:[%s266 + $0xc0] sm:$0xff]
      %v344 = vld [vmem:[%s266 + $0xc8] sm:$0xff]
      %v345 = vld [vmem:[%s266 + $0xd0] sm:$0xff]
      %v346 = vld [vmem:[%s266 + $0xd8] sm:$0xff]
      %v347 = vld [vmem:[%s266 + $0xe0] sm:$0xff]
      %v348 = vld [vmem:[%s266 + $0xe8] sm:$0xff]
      %v349 = vld [vmem:[%s266 + $0xf0] sm:$0xff]
      %v350 = vld [vmem:[%s266 + $0xf8] sm:$0xff]
      %v351 = vld [vmem:[%s275] sm:$0xf]
      %v353 = vlaneseq
      %v354 = vshrl.u32 %v353, 7
      %v355 = vsub.s32 0, %v354
      %v356 = vrot.slane %v351, %v355
      %v357 = vlaneseq
      %v358 = vshrl.u32 %v357, 7
      %v359 = vsub.s32 1, %v358
      %v360 = vrot.slane %v351, %v359
      %v361 = vlaneseq
      %v362 = vshrl.u32 %v361, 7
      %v363 = vsub.s32 2, %v362
      %v364 = vrot.slane %v351, %v363
      %v365 = vlaneseq
      %v366 = vshrl.u32 %v365, 7
      %v367 = vsub.s32 3, %v366
      %v368 = vrot.slane %v351, %v367
      %v405 = vunpack.c.l.b16 %v319
      %v406 = vunpack.c.h.b16 %v319
      %v407 = vunpack.c.l.b16 %v320
      %v408 = vunpack.c.h.b16 %v320
      %v409 = vunpack.c.l.b16 %v321
      %v410 = vunpack.c.h.b16 %v321
      %v411 = vunpack.c.l.b16 %v322
      %v412 = vunpack.c.h.b16 %v322
      %v413 = vunpack.c.l.b16 %v323
      %v414 = vunpack.c.h.b16 %v323
      %v415 = vunpack.c.l.b16 %v324
      %v416 = vunpack.c.h.b16 %v324
      %v417 = vunpack.c.l.b16 %v325
      %v418 = vunpack.c.h.b16 %v325
      %v419 = vunpack.c.l.b16 %v326
      %v420 = vunpack.c.h.b16 %v326
      %v421 = vunpack.c.l.b16 %v327
      %v422 = vunpack.c.h.b16 %v327
      %v423 = vunpack.c.l.b16 %v328
      %v424 = vunpack.c.h.b16 %v328
      %v425 = vunpack.c.l.b16 %v329
      %v426 = vunpack.c.h.b16 %v329
      %v427 = vunpack.c.l.b16 %v330
      %v428 = vunpack.c.h.b16 %v330
      %v429 = vunpack.c.l.b16 %v331
      %v430 = vunpack.c.h.b16 %v331
      %v431 = vunpack.c.l.b16 %v332
      %v432 = vunpack.c.h.b16 %v332
      %v433 = vunpack.c.l.b16 %v333
      %v434 = vunpack.c.h.b16 %v333
      %v435 = vunpack.c.l.b16 %v334
      %v436 = vunpack.c.h.b16 %v334
      %v437 = vunpack.c.l.b16 %v335
      %v438 = vunpack.c.h.b16 %v335
      %v439 = vunpack.c.l.b16 %v336
      %v440 = vunpack.c.h.b16 %v336
      %v441 = vunpack.c.l.b16 %v337
      %v442 = vunpack.c.h.b16 %v337
      %v443 = vunpack.c.l.b16 %v338
      %v444 = vunpack.c.h.b16 %v338
      %v445 = vunpack.c.l.b16 %v339
      %v446 = vunpack.c.h.b16 %v339
      %v447 = vunpack.c.l.b16 %v340
      %v448 = vunpack.c.h.b16 %v340
      %v449 = vunpack.c.l.b16 %v341
      %v450 = vunpack.c.h.b16 %v341
      %v451 = vunpack.c.l.b16 %v342
      %v452 = vunpack.c.h.b16 %v342
      %v453 = vunpack.c.l.b16 %v343
      %v454 = vunpack.c.h.b16 %v343
      %v455 = vunpack.c.l.b16 %v344
      %v456 = vunpack.c.h.b16 %v344
      %v457 = vunpack.c.l.b16 %v345
      %v458 = vunpack.c.h.b16 %v345
      %v459 = vunpack.c.l.b16 %v346
      %v460 = vunpack.c.h.b16 %v346
      %v461 = vunpack.c.l.b16 %v347
      %v462 = vunpack.c.h.b16 %v347
      %v463 = vunpack.c.l.b16 %v348
      %v464 = vunpack.c.h.b16 %v348
      %v465 = vunpack.c.l.b16 %v349
      %v466 = vunpack.c.h.b16 %v349
      %v467 = vunpack.c.l.b16 %v350
      %v468 = vunpack.c.h.b16 %v350
      %v469 = vpack.c.b16 %v409, %v405
      %v470 = vpack.c.b16 %v410, %v406
      %v471 = vpack.c.b16 %v411, %v407
      %v472 = vpack.c.b16 %v412, %v408
      %v473 = vpack.c.b16 %v417, %v413
      %v474 = vpack.c.b16 %v418, %v414
      %v475 = vpack.c.b16 %v419, %v415
      %v476 = vpack.c.b16 %v420, %v416
      %v477 = vpack.c.b16 %v425, %v421
      %v478 = vpack.c.b16 %v426, %v422
      %v479 = vpack.c.b16 %v427, %v423
      %v480 = vpack.c.b16 %v428, %v424
      %v481 = vpack.c.b16 %v433, %v429
      %v482 = vpack.c.b16 %v434, %v430
      %v483 = vpack.c.b16 %v435, %v431
      %v484 = vpack.c.b16 %v436, %v432
      %v485 = vpack.c.b16 %v441, %v437
      %v486 = vpack.c.b16 %v442, %v438
      %v487 = vpack.c.b16 %v443, %v439
      %v488 = vpack.c.b16 %v444, %v440
      %v489 = vpack.c.b16 %v449, %v445
      %v490 = vpack.c.b16 %v450, %v446
      %v491 = vpack.c.b16 %v451, %v447
      %v492 = vpack.c.b16 %v452, %v448
      %v493 = vpack.c.b16 %v457, %v453
      %v494 = vpack.c.b16 %v458, %v454
      %v495 = vpack.c.b16 %v459, %v455
      %v496 = vpack.c.b16 %v460, %v456
      %v497 = vpack.c.b16 %v465, %v461
      %v498 = vpack.c.b16 %v466, %v462
      %v499 = vpack.c.b16 %v467, %v463
      %v500 = vpack.c.b16 %v468, %v464
      %533 = vmatprep.subr.bf16.mxu0 %v470
      %534 = vmatpush1.bf16.msra.mxu0 %v469
      %535 = vmatprep.subr.bf16.mxu0 %v474
      %536 = vmatpush1.bf16.msra.mxu0 %v473
      %537 = vmatprep.subr.bf16.mxu0 %v478
      %538 = vmatpush1.bf16.msra.mxu0 %v477
      %539 = vmatprep.subr.bf16.mxu0 %v482
      %540 = vmatpush1.bf16.msra.mxu0 %v481
      %541 = vmatprep.subr.bf16.mxu0 %v486
      %542 = vmatpush1.bf16.msra.mxu0 %v485
      %543 = vmatprep.subr.bf16.mxu0 %v490
      %544 = vmatpush1.bf16.msra.mxu0 %v489
      %545 = vmatprep.subr.bf16.mxu0 %v494
      %546 = vmatpush1.bf16.msra.mxu0 %v493
      %547 = vmatprep.subr.bf16.mxu0 %v498
      %548 = vmatpush1.bf16.msra.mxu0 %v497
      %549 = vmatprep.subr.bf16.mxu0 0
      %550 = vmatpush1.bf16.msra.mxu0 0
      %551 = vmatprep.subr.bf16.mxu0 0
      %552 = vmatpush1.bf16.msra.mxu0 0
      %553 = vmatprep.subr.bf16.mxu0 0
      %554 = vmatpush1.bf16.msra.mxu0 0
      %555 = vmatprep.subr.bf16.mxu0 0
      %556 = vmatpush1.bf16.msra.mxu0 0
      %557 = vmatprep.subr.bf16.mxu0 0
      %558 = vmatpush1.bf16.msra.mxu0 0
      %559 = vmatprep.subr.bf16.mxu0 0
      %560 = vmatpush1.bf16.msra.mxu0 0
      %561 = vmatprep.subr.bf16.mxu0 0
      %562 = vmatpush1.bf16.msra.mxu0 0
      %563 = vmatprep.subr.bf16.mxu0 0
      %564 = vmatpush1.bf16.msra.mxu0 0
      %565 = vmatprep.mubr.bf16.mxu0 0
      %566 = vmatmul.mubr.bf16.gmra.mrb[0].mxu0 %v315
      %v567 = vpop.f32.mrb[0].mxu0
      %v568 = vadd.f32 %v356, %v567
      %v569 = vpop.f32.mrb[0].mxu0
      %v570 = vadd.f32 %v360, %v569
      %v571 = vpop.f32.mrb[0].mxu0
      %v572 = vadd.f32 %v356, %v571
      %v573 = vpop.f32.mrb[0].mxu0
      %v574 = vadd.f32 %v360, %v573
      %575 = vmatprep.mubr.bf16.mxu0 0
      %576 = vmatmul.mubr.bf16.gmra.mrb[0].mxu0 %v316
      %v577 = vpop.f32.mrb[0].mxu0
      %v578 = vadd.f32 %v356, %v577
      %v579 = vpop.f32.mrb[0].mxu0
      %v580 = vadd.f32 %v360, %v579
      %v581 = vpop.f32.mrb[0].mxu0
      %v582 = vadd.f32 %v356, %v581
      %v583 = vpop.f32.mrb[0].mxu0
      %v584 = vadd.f32 %v360, %v583
      %585 = vmatprep.mubr.bf16.mxu0 0
      %586 = vmatmul.mubr.bf16.gmra.mrb[0].mxu0 %v317
      %v587 = vpop.f32.mrb[0].mxu0
      %v588 = vadd.f32 %v356, %v587
      %v589 = vpop.f32.mrb[0].mxu0
      %v590 = vadd.f32 %v360, %v589
      %v591 = vpop.f32.mrb[0].mxu0
      %v592 = vadd.f32 %v356, %v591
      %v593 = vpop.f32.mrb[0].mxu0
      %v594 = vadd.f32 %v360, %v593
      %595 = vmatprep.mubr.bf16.mxu0 0
      %596 = vmatmul.mubr.bf16.gmra.mrb[0].mxu0 %v318
      %v597 = vpop.f32.mrb[0].mxu0
      %v598 = vadd.f32 %v356, %v597
      %v599 = vpop.f32.mrb[0].mxu0
      %v600 = vadd.f32 %v360, %v599
      %v601 = vpop.f32.mrb[0].mxu0
      %v602 = vadd.f32 %v356, %v601
      %v603 = vpop.f32.mrb[0].mxu0
      %v604 = vadd.f32 %v360, %v603
      %605 = vdwg.mxu0
      %606 = vmatprep.subr.bf16.mxu0 %v472
      %607 = vmatpush1.bf16.msra.mxu0 %v471
      %608 = vmatprep.subr.bf16.mxu0 %v476
      %609 = vmatpush1.bf16.msra.mxu0 %v475
      %610 = vmatprep.subr.bf16.mxu0 %v480
      %611 = vmatpush1.bf16.msra.mxu0 %v479
      %612 = vmatprep.subr.bf16.mxu0 %v484
      %613 = vmatpush1.bf16.msra.mxu0 %v483
      %614 = vmatprep.subr.bf16.mxu0 %v488
      %615 = vmatpush1.bf16.msra.mxu0 %v487
      %616 = vmatprep.subr.bf16.mxu0 %v492
      %617 = vmatpush1.bf16.msra.mxu0 %v491
      %618 = vmatprep.subr.bf16.mxu0 %v496
      %619 = vmatpush1.bf16.msra.mxu0 %v495
      %620 = vmatprep.subr.bf16.mxu0 %v500
      %621 = vmatpush1.bf16.msra.mxu0 %v499
      %622 = vmatprep.subr.bf16.mxu0 0
      %623 = vmatpush1.bf16.msra.mxu0 0
      %624 = vmatprep.subr.bf16.mxu0 0
      %625 = vmatpush1.bf16.msra.mxu0 0
      %626 = vmatprep.subr.bf16.mxu0 0
      %627 = vmatpush1.bf16.msra.mxu0 0
      %628 = vmatprep.subr.bf16.mxu0 0
      %629 = vmatpush1.bf16.msra.mxu0 0
      %630 = vmatprep.subr.bf16.mxu0 0
      %631 = vmatpush1.bf16.msra.mxu0 0
      %632 = vmatprep.subr.bf16.mxu0 0
      %633 = vmatpush1.bf16.msra.mxu0 0
      %634 = vmatprep.subr.bf16.mxu0 0
      %635 = vmatpush1.bf16.msra.mxu0 0
      %636 = vmatprep.subr.bf16.mxu0 0
      %637 = vmatpush1.bf16.msra.mxu0 0
      %638 = vmatprep.mubr.bf16.mxu0 0
      %639 = vmatmul.mubr.bf16.gmra.mrb[0].mxu0 %v315
      %v640 = vpop.f32.mrb[0].mxu0
      %v641 = vadd.f32 %v364, %v640
      %v642 = vpop.f32.mrb[0].mxu0
      %v643 = vadd.f32 %v368, %v642
      %v644 = vpop.f32.mrb[0].mxu0
      %v645 = vadd.f32 %v364, %v644
      %v646 = vpop.f32.mrb[0].mxu0
      %v647 = vadd.f32 %v368, %v646
      %648 = vmatprep.mubr.bf16.mxu0 0
      %649 = vmatmul.mubr.bf16.gmra.mrb[0].mxu0 %v316
      %v650 = vpop.f32.mrb[0].mxu0
      %v651 = vadd.f32 %v364, %v650
      %v652 = vpop.f32.mrb[0].mxu0
      %v653 = vadd.f32 %v368, %v652
      %v654 = vpop.f32.mrb[0].mxu0
      %v655 = vadd.f32 %v364, %v654
      %v656 = vpop.f32.mrb[0].mxu0
      %v657 = vadd.f32 %v368, %v656
      %658 = vmatprep.mubr.bf16.mxu0 0
      %659 = vmatmul.mubr.bf16.gmra.mrb[0].mxu0 %v317
      %v660 = vpop.f32.mrb[0].mxu0
      %v661 = vadd.f32 %v364, %v660
      %v662 = vpop.f32.mrb[0].mxu0
      %v663 = vadd.f32 %v368, %v662
      %v664 = vpop.f32.mrb[0].mxu0
      %v665 = vadd.f32 %v364, %v664
      %v666 = vpop.f32.mrb[0].mxu0
      %v667 = vadd.f32 %v368, %v666
      %668 = vmatprep.mubr.bf16.mxu0 0
      %669 = vmatmul.mubr.bf16.gmra.mrb[0].mxu0 %v318
      %v670 = vpop.f32.mrb[0].mxu0
      %v671 = vadd.f32 %v364, %v670
      %v672 = vpop.f32.mrb[0].mxu0
      %v673 = vadd.f32 %v368, %v672
      %v674 = vpop.f32.mrb[0].mxu0
      %v675 = vadd.f32 %v364, %v674
      %v676 = vpop.f32.mrb[0].mxu0
      %v677 = vadd.f32 %v368, %v676
      %678 = vdwg.mxu0
      %679 = vst [vmem:[#allocation2] sm:$0xff] %v568
      %680 = vst [vmem:[#allocation2 + $0x8] sm:$0xff] %v570
      %681 = vst [vmem:[#allocation2 + $0x10] sm:$0xff] %v641
      %682 = vst [vmem:[#allocation2 + $0x18] sm:$0xff] %v643
      %683 = vst [vmem:[#allocation2 + $0x20] sm:$0xff] %v572
      %684 = vst [vmem:[#allocation2 + $0x28] sm:$0xff] %v574
      %685 = vst [vmem:[#allocation2 + $0x30] sm:$0xff] %v645
      %686 = vst [vmem:[#allocation2 + $0x38] sm:$0xff] %v647
      %687 = vst [vmem:[#allocation2 + $0x40] sm:$0xff] %v578
      %688 = vst [vmem:[#allocation2 + $0x48] sm:$0xff] %v580
      %689 = vst [vmem:[#allocation2 + $0x50] sm:$0xff] %v651
      %690 = vst [vmem:[#allocation2 + $0x58] sm:$0xff] %v653
      %691 = vst [vmem:[#allocation2 + $0x60] sm:$0xff] %v582
      %692 = vst [vmem:[#allocation2 + $0x68] sm:$0xff] %v584
      %693 = vst [vmem:[#allocation2 + $0x70] sm:$0xff] %v655
      %694 = vst [vmem:[#allocation2 + $0x78] sm:$0xff] %v657
      %695 = vst [vmem:[#allocation2 + $0x80] sm:$0xff] %v588
      %696 = vst [vmem:[#allocation2 + $0x88] sm:$0xff] %v590
      %697 = vst [vmem:[#allocation2 + $0x90] sm:$0xff] %v661
      %698 = vst [vmem:[#allocation2 + $0x98] sm:$0xff] %v663
      %699 = vst [vmem:[#allocation2 + $0xa0] sm:$0xff] %v592
      %700 = vst [vmem:[#allocation2 + $0xa8] sm:$0xff] %v594
      %701 = vst [vmem:[#allocation2 + $0xb0] sm:$0xff] %v665
      %702 = vst [vmem:[#allocation2 + $0xb8] sm:$0xff] %v667
      %703 = vst [vmem:[#allocation2 + $0xc0] sm:$0xff] %v598
      %704 = vst [vmem:[#allocation2 + $0xc8] sm:$0xff] %v600
      %705 = vst [vmem:[#allocation2 + $0xd0] sm:$0xff] %v671
      %706 = vst [vmem:[#allocation2 + $0xd8] sm:$0xff] %v673
      %707 = vst [vmem:[#allocation2 + $0xe0] sm:$0xff] %v602
      %708 = vst [vmem:[#allocation2 + $0xe8] sm:$0xff] %v604
      %709 = vst [vmem:[#allocation2 + $0xf0] sm:$0xff] %v675
      %710 = vst [vmem:[#allocation2 + $0xf8] sm:$0xff] %v677
      %v711 = vld [vmem:[%s271] sm:$0xff]
      %v712 = vld [vmem:[%s271 + $0x8] sm:$0xff]
      %v713 = vld [vmem:[%s271 + $0x10] sm:$0xff]
      %v714 = vld [vmem:[%s271 + $0x18] sm:$0xff]
      %v715 = vld [vmem:[%s271 + $0x20] sm:$0xff]
      %v716 = vld [vmem:[%s271 + $0x28] sm:$0xff]
      %v717 = vld [vmem:[%s271 + $0x30] sm:$0xff]
      %v718 = vld [vmem:[%s271 + $0x38] sm:$0xff]
      %v719 = vld [vmem:[%s271 + $0x40] sm:$0xff]
      %v720 = vld [vmem:[%s271 + $0x48] sm:$0xff]
      %v721 = vld [vmem:[%s271 + $0x50] sm:$0xff]
      %v722 = vld [vmem:[%s271 + $0x58] sm:$0xff]
      %v723 = vld [vmem:[%s271 + $0x60] sm:$0xff]
      %v724 = vld [vmem:[%s271 + $0x68] sm:$0xff]
      %v725 = vld [vmem:[%s271 + $0x70] sm:$0xff]
      %v726 = vld [vmem:[%s271 + $0x78] sm:$0xff]
      %v727 = vld [vmem:[%s271 + $0x80] sm:$0xff]
      %v728 = vld [vmem:[%s271 + $0x88] sm:$0xff]
      %v729 = vld [vmem:[%s271 + $0x90] sm:$0xff]
      %v730 = vld [vmem:[%s271 + $0x98] sm:$0xff]
      %v731 = vld [vmem:[%s271 + $0xa0] sm:$0xff]
      %v732 = vld [vmem:[%s271 + $0xa8] sm:$0xff]
      %v733 = vld [vmem:[%s271 + $0xb0] sm:$0xff]
      %v734 = vld [vmem:[%s271 + $0xb8] sm:$0xff]
      %v735 = vld [vmem:[%s271 + $0xc0] sm:$0xff]
      %v736 = vld [vmem:[%s271 + $0xc8] sm:$0xff]
      %v737 = vld [vmem:[%s271 + $0xd0] sm:$0xff]
      %v738 = vld [vmem:[%s271 + $0xd8] sm:$0xff]
      %v739 = vld [vmem:[%s271 + $0xe0] sm:$0xff]
      %v740 = vld [vmem:[%s271 + $0xe8] sm:$0xff]
      %v741 = vld [vmem:[%s271 + $0xf0] sm:$0xff]
      %v742 = vld [vmem:[%s271 + $0xf8] sm:$0xff]
      %v743 = vld [vmem:[#allocation2] sm:$0xff]
      %v744 = vld [vmem:[#allocation2 + $0x8] sm:$0xff]
      %v745 = vld [vmem:[#allocation2 + $0x10] sm:$0xff]
      %v746 = vld [vmem:[#allocation2 + $0x18] sm:$0xff]
      %v779 = vunpack.c.l.b16 %v711
      %v780 = vunpack.c.h.b16 %v711
      %v781 = vunpack.c.l.b16 %v712
      %v782 = vunpack.c.h.b16 %v712
      %v783 = vunpack.c.l.b16 %v713
      %v784 = vunpack.c.h.b16 %v713
      %v785 = vunpack.c.l.b16 %v714
      %v786 = vunpack.c.h.b16 %v714
      %v787 = vunpack.c.l.b16 %v715
      %v788 = vunpack.c.h.b16 %v715
      %v789 = vunpack.c.l.b16 %v716
      %v790 = vunpack.c.h.b16 %v716
      %v791 = vunpack.c.l.b16 %v717
      %v792 = vunpack.c.h.b16 %v717
      %v793 = vunpack.c.l.b16 %v718
      %v794 = vunpack.c.h.b16 %v718
      %v795 = vunpack.c.l.b16 %v719
      %v796 = vunpack.c.h.b16 %v719
      %v797 = vunpack.c.l.b16 %v720
      %v798 = vunpack.c.h.b16 %v720
      %v799 = vunpack.c.l.b16 %v721
      %v800 = vunpack.c.h.b16 %v721
      %v801 = vunpack.c.l.b16 %v722
      %v802 = vunpack.c.h.b16 %v722
      %v803 = vunpack.c.l.b16 %v723
      %v804 = vunpack.c.h.b16 %v723
      %v805 = vunpack.c.l.b16 %v724
      %v806 = vunpack.c.h.b16 %v724
      %v807 = vunpack.c.l.b16 %v725
      %v808 = vunpack.c.h.b16 %v725
      %v809 = vunpack.c.l.b16 %v726
      %v810 = vunpack.c.h.b16 %v726
      %v811 = vunpack.c.l.b16 %v727
      %v812 = vunpack.c.h.b16 %v727
      %v813 = vunpack.c.l.b16 %v728
      %v814 = vunpack.c.h.b16 %v728
      %v815 = vunpack.c.l.b16 %v729
      %v816 = vunpack.c.h.b16 %v729
      %v817 = vunpack.c.l.b16 %v730
      %v818 = vunpack.c.h.b16 %v730
      %v819 = vunpack.c.l.b16 %v731
      %v820 = vunpack.c.h.b16 %v731
      %v821 = vunpack.c.l.b16 %v732
      %v822 = vunpack.c.h.b16 %v732
      %v823 = vunpack.c.l.b16 %v733
      %v824 = vunpack.c.h.b16 %v733
      %v825 = vunpack.c.l.b16 %v734
      %v826 = vunpack.c.h.b16 %v734
      %v827 = vunpack.c.l.b16 %v735
      %v828 = vunpack.c.h.b16 %v735
      %v829 = vunpack.c.l.b16 %v736
      %v830 = vunpack.c.h.b16 %v736
      %v831 = vunpack.c.l.b16 %v737
      %v832 = vunpack.c.h.b16 %v737
      %v833 = vunpack.c.l.b16 %v738
      %v834 = vunpack.c.h.b16 %v738
      %v835 = vunpack.c.l.b16 %v739
      %v836 = vunpack.c.h.b16 %v739
      %v837 = vunpack.c.l.b16 %v740
      %v838 = vunpack.c.h.b16 %v740
      %v839 = vunpack.c.l.b16 %v741
      %v840 = vunpack.c.h.b16 %v741
      %v841 = vunpack.c.l.b16 %v742
      %v842 = vunpack.c.h.b16 %v742
      %v843 = vpack.c.b16 %v783, %v779
      %v844 = vpack.c.b16 %v784, %v780
      %v845 = vpack.c.b16 %v785, %v781
      %v846 = vpack.c.b16 %v786, %v782
      %v847 = vpack.c.b16 %v791, %v787
      %v848 = vpack.c.b16 %v792, %v788
      %v849 = vpack.c.b16 %v793, %v789
      %v850 = vpack.c.b16 %v794, %v790
      %v851 = vpack.c.b16 %v799, %v795
      %v852 = vpack.c.b16 %v800, %v796
      %v853 = vpack.c.b16 %v801, %v797
      %v854 = vpack.c.b16 %v802, %v798
      %v855 = vpack.c.b16 %v807, %v803
      %v856 = vpack.c.b16 %v808, %v804
      %v857 = vpack.c.b16 %v809, %v805
      %v858 = vpack.c.b16 %v810, %v806
      %v859 = vpack.c.b16 %v815, %v811
      %v860 = vpack.c.b16 %v816, %v812
      %v861 = vpack.c.b16 %v817, %v813
      %v862 = vpack.c.b16 %v818, %v814
      %v863 = vpack.c.b16 %v823, %v819
      %v864 = vpack.c.b16 %v824, %v820
      %v865 = vpack.c.b16 %v825, %v821
      %v866 = vpack.c.b16 %v826, %v822
      %v867 = vpack.c.b16 %v831, %v827
      %v868 = vpack.c.b16 %v832, %v828
      %v869 = vpack.c.b16 %v833, %v829
      %v870 = vpack.c.b16 %v834, %v830
      %v871 = vpack.c.b16 %v839, %v835
      %v872 = vpack.c.b16 %v840, %v836
      %v873 = vpack.c.b16 %v841, %v837
      %v874 = vpack.c.b16 %v842, %v838
      %907 = vmatprep.subr.bf16.mxu0 %v844
      %908 = vmatpush1.bf16.msra.mxu0 %v843
      %909 = vmatprep.subr.bf16.mxu0 %v848
      %910 = vmatpush1.bf16.msra.mxu0 %v847
      %911 = vmatprep.subr.bf16.mxu0 %v852
      %912 = vmatpush1.bf16.msra.mxu0 %v851
      %913 = vmatprep.subr.bf16.mxu0 %v856
      %914 = vmatpush1.bf16.msra.mxu0 %v855
      %915 = vmatprep.subr.bf16.mxu0 %v860
      %916 = vmatpush1.bf16.msra.mxu0 %v859
      %917 = vmatprep.subr.bf16.mxu0 %v864
      %918 = vmatpush1.bf16.msra.mxu0 %v863
      %919 = vmatprep.subr.bf16.mxu0 %v868
      %920 = vmatpush1.bf16.msra.mxu0 %v867
      %921 = vmatprep.subr.bf16.mxu0 %v872
      %922 = vmatpush1.bf16.msra.mxu0 %v871
      %923 = vmatprep.subr.bf16.mxu0 0
      %924 = vmatpush1.bf16.msra.mxu0 0
      %925 = vmatprep.subr.bf16.mxu0 0
      %926 = vmatpush1.bf16.msra.mxu0 0
      %927 = vmatprep.subr.bf16.mxu0 0
      %928 = vmatpush1.bf16.msra.mxu0 0
      %929 = vmatprep.subr.bf16.mxu0 0
      %930 = vmatpush1.bf16.msra.mxu0 0
      %931 = vmatprep.subr.bf16.mxu0 0
      %932 = vmatpush1.bf16.msra.mxu0 0
      %933 = vmatprep.subr.bf16.mxu0 0
      %934 = vmatpush1.bf16.msra.mxu0 0
      %935 = vmatprep.subr.bf16.mxu0 0
      %936 = vmatpush1.bf16.msra.mxu0 0
      %937 = vmatprep.subr.bf16.mxu0 0
      %938 = vmatpush1.bf16.msra.mxu0 0
      %939 = vmatprep.mubr.bf16.mxu0 0
      %940 = vmatmul.mubr.bf16.gmra.mrb[0].mxu0 0
      %v941 = vpop.f32.mrb[0].mxu0
      %v942 = vadd.f32 0.0, %v941
      %v943 = vpop.f32.mrb[0].mxu0
      %v944 = vadd.f32 0.0, %v943
      %v945 = vpop.f32.mrb[0].mxu0
      %v946 = vpop.f32.mrb[0].mxu0
      %947 = vdwg.mxu0
      %948 = vmatprep.subr.bf16.mxu0 %v846
      %949 = vmatpush1.bf16.msra.mxu0 %v845
      %950 = vmatprep.subr.bf16.mxu0 %v850
      %951 = vmatpush1.bf16.msra.mxu0 %v849
      %952 = vmatprep.subr.bf16.mxu0 %v854
      %953 = vmatpush1.bf16.msra.mxu0 %v853
      %954 = vmatprep.subr.bf16.mxu0 %v858
      %955 = vmatpush1.bf16.msra.mxu0 %v857
      %956 = vmatprep.subr.bf16.mxu0 %v862
      %957 = vmatpush1.bf16.msra.mxu0 %v861
      %958 = vmatprep.subr.bf16.mxu0 %v866
      %959 = vmatpush1.bf16.msra.mxu0 %v865
      %960 = vmatprep.subr.bf16.mxu0 %v870
      %961 = vmatpush1.bf16.msra.mxu0 %v869
      %962 = vmatprep.subr.bf16.mxu0 %v874
      %963 = vmatpush1.bf16.msra.mxu0 %v873
      %964 = vmatprep.subr.bf16.mxu0 0
      %965 = vmatpush1.bf16.msra.mxu0 0
      %966 = vmatprep.subr.bf16.mxu0 0
      %967 = vmatpush1.bf16.msra.mxu0 0
      %968 = vmatprep.subr.bf16.mxu0 0
      %969 = vmatpush1.bf16.msra.mxu0 0
      %970 = vmatprep.subr.bf16.mxu0 0
      %971 = vmatpush1.bf16.msra.mxu0 0
      %972 = vmatprep.subr.bf16.mxu0 0
      %973 = vmatpush1.bf16.msra.mxu0 0
      %974 = vmatprep.subr.bf16.mxu0 0
      %975 = vmatpush1.bf16.msra.mxu0 0
      %976 = vmatprep.subr.bf16.mxu0 0
      %977 = vmatpush1.bf16.msra.mxu0 0
      %978 = vmatprep.subr.bf16.mxu0 0
      %979 = vmatpush1.bf16.msra.mxu0 0
      %980 = vmatprep.mubr.bf16.mxu0 0
      %981 = vmatmul.mubr.bf16.gmra.mrb[0].mxu0 0
      %v982 = vpop.f32.mrb[0].mxu0
      %v983 = vadd.f32 0.0, %v982
      %v984 = vpop.f32.mrb[0].mxu0
      %v985 = vadd.f32 0.0, %v984
      %v986 = vpop.f32.mrb[0].mxu0
      %v987 = vpop.f32.mrb[0].mxu0
      %988 = vdwg.mxu0
      %v989 = vadd.f32 %v743, %v942
      %v990 = vadd.f32 %v744, %v944
      %v991 = vadd.f32 %v745, %v983
      %v992 = vadd.f32 %v746, %v985
      %v993 = vpack.c.bf16 %v989, %v989
      %v994 = vpack.c.bf16 %v990, %v990
      %v995 = vpack.c.bf16 %v991, %v991
      %v996 = vpack.c.bf16 %v992, %v992
      %v997 = vmul.bf16 %v993, 1056980736
      %v998 = vmul.bf16 %v994, 1056980736
      %v999 = vmul.bf16 %v995, 1056980736
      %v1000 = vtanh.bf16.pop %v997
      %v1001 = vtanh.bf16.pop %v998
      %v1002 = vtanh.bf16.pop %v999
      %v1003 = vadd.bf16 %v1000, 1065369472
      %v1004 = vadd.bf16 %v1001, 1065369472
      %v1005 = vadd.bf16 %v1002, 1065369472
      %v1006 = vmul.bf16 %v1003, 1056980736
      %v1007 = vmul.bf16 %v1004, 1056980736
      %v1008 = vmul.bf16 %v1005, 1056980736
      %v1009 = vtanh.bf16.pop %v996
      %v1010 = vunpack.c.l.bf16 %v1007
      %v1011 = vmul.f32 %v1010, 0.0
      %v1012 = vmul.bf16 %v1006, %v1009
      %v1013 = vunpack.c.l.bf16 %v1012
      %v1014 = vadd.f32 %v1011, %v1013
      %v1015 = vpack.c.bf16 %v1014, %v1014
      %v1016 = vtanh.bf16.pop %v1015
      %v1017 = vmul.bf16 %v1008, %v1016
      %v1018 = vunpack.c.l.bf16 %v1017
      %1019 = vst [vmem:[#allocation3] sm:$0xff] %v1018
      %v1020 = vld [vmem:[#allocation2 + $0x20] sm:$0xff]
      %v1021 = vld [vmem:[#allocation2 + $0x28] sm:$0xff]
      %v1022 = vld [vmem:[#allocation2 + $0x30] sm:$0xff]
      %v1023 = vld [vmem:[#allocation2 + $0x38] sm:$0xff]
      %1024 = vmatprep.subr.bf16.mxu0 %v844
      %1025 = vmatpush1.bf16.msra.mxu0 %v843
      %1026 = vmatprep.subr.bf16.mxu0 %v848
      %1027 = vmatpush1.bf16.msra.mxu0 %v847
      %1028 = vmatprep.subr.bf16.mxu0 %v852
      %1029 = vmatpush1.bf16.msra.mxu0 %v851
      %1030 = vmatprep.subr.bf16.mxu0 %v856
      %1031 = vmatpush1.bf16.msra.mxu0 %v855
      %1032 = vmatprep.subr.bf16.mxu0 %v860
      %1033 = vmatpush1.bf16.msra.mxu0 %v859
      %1034 = vmatprep.subr.bf16.mxu0 %v864
      %1035 = vmatpush1.bf16.msra.mxu0 %v863
      %1036 = vmatprep.subr.bf16.mxu0 %v868
      %1037 = vmatpush1.bf16.msra.mxu0 %v867
      %1038 = vmatprep.subr.bf16.mxu0 %v872
      %1039 = vmatpush1.bf16.msra.mxu0 %v871
      %1040 = vmatprep.subr.bf16.mxu0 0
      %1041 = vmatpush1.bf16.msra.mxu0 0
      %1042 = vmatprep.subr.bf16.mxu0 0
      %1043 = vmatpush1.bf16.msra.mxu0 0
      %1044 = vmatprep.subr.bf16.mxu0 0
      %1045 = vmatpush1.bf16.msra.mxu0 0
      %1046 = vmatprep.subr.bf16.mxu0 0
      %1047 = vmatpush1.bf16.msra.mxu0 0
      %1048 = vmatprep.subr.bf16.mxu0 0
      %1049 = vmatpush1.bf16.msra.mxu0 0
      %1050 = vmatprep.subr.bf16.mxu0 0
      %1051 = vmatpush1.bf16.msra.mxu0 0
      %1052 = vmatprep.subr.bf16.mxu0 0
      %1053 = vmatpush1.bf16.msra.mxu0 0
      %1054 = vmatprep.subr.bf16.mxu0 0
      %1055 = vmatpush1.bf16.msra.mxu0 0
      %1056 = vmatprep.mubr.bf16.mxu0 0
      %1057 = vmatmul.mubr.bf16.gmra.mrb[0].mxu0 %v1017
      %v1058 = vpop.f32.mrb[0].mxu0
      %v1059 = vadd.f32 0.0, %v1058
      %v1060 = vpop.f32.mrb[0].mxu0
      %v1061 = vadd.f32 0.0, %v1060
      %v1062 = vpop.f32.mrb[0].mxu0
      %v1063 = vpop.f32.mrb[0].mxu0
      %1064 = vdwg.mxu0
      %1065 = vmatprep.subr.bf16.mxu0 %v846
      %1066 = vmatpush1.bf16.msra.mxu0 %v845
      %1067 = vmatprep.subr.bf16.mxu0 %v850
      %1068 = vmatpush1.bf16.msra.mxu0 %v849
      %1069 = vmatprep.subr.bf16.mxu0 %v854
      %1070 = vmatpush1.bf16.msra.mxu0 %v853
      %1071 = vmatprep.subr.bf16.mxu0 %v858
      %1072 = vmatpush1.bf16.msra.mxu0 %v857
      %1073 = vmatprep.subr.bf16.mxu0 %v862
      %1074 = vmatpush1.bf16.msra.mxu0 %v861
      %1075 = vmatprep.subr.bf16.mxu0 %v866
      %1076 = vmatpush1.bf16.msra.mxu0 %v865
      %1077 = vmatprep.subr.bf16.mxu0 %v870
      %1078 = vmatpush1.bf16.msra.mxu0 %v869
      %1079 = vmatprep.subr.bf16.mxu0 %v874
      %1080 = vmatpush1.bf16.msra.mxu0 %v873
      %1081 = vmatprep.subr.bf16.mxu0 0
      %1082 = vmatpush1.bf16.msra.mxu0 0
      %1083 = vmatprep.subr.bf16.mxu0 0
      %1084 = vmatpush1.bf16.msra.mxu0 0
      %1085 = vmatprep.subr.bf16.mxu0 0
      %1086 = vmatpush1.bf16.msra.mxu0 0
      %1087 = vmatprep.subr.bf16.mxu0 0
      %1088 = vmatpush1.bf16.msra.mxu0 0
      %1089 = vmatprep.subr.bf16.mxu0 0
      %1090 = vmatpush1.bf16.msra.mxu0 0
      %1091 = vmatprep.subr.bf16.mxu0 0
      %1092 = vmatpush1.bf16.msra.mxu0 0
      %1093 = vmatprep.subr.bf16.mxu0 0
      %1094 = vmatpush1.bf16.msra.mxu0 0
      %1095 = vmatprep.subr.bf16.mxu0 0
      %1096 = vmatpush1.bf16.msra.mxu0 0
      %1097 = vmatprep.mubr.bf16.mxu0 0
      %1098 = vmatmul.mubr.bf16.gmra.mrb[0].mxu0 %v1017
      %v1099 = vpop.f32.mrb[0].mxu0
      %v1100 = vadd.f32 0.0, %v1099
      %v1101 = vpop.f32.mrb[0].mxu0
      %v1102 = vadd.f32 0.0, %v1101
      %v1103 = vpop.f32.mrb[0].mxu0
      %v1104 = vpop.f32.mrb[0].mxu0
      %1105 = vdwg.mxu0
      %v1106 = vadd.f32 %v1020, %v1059
      %v1107 = vadd.f32 %v1021, %v1061
      %v1108 = vadd.f32 %v1022, %v1100
      %v1109 = vadd.f32 %v1023, %v1102
      %v1110 = vpack.c.bf16 %v1106, %v1106
      %v1111 = vpack.c.bf16 %v1107, %v1107
      %v1112 = vpack.c.bf16 %v1108, %v1108
      %v1113 = vpack.c.bf16 %v1109, %v1109
      %v1114 = vmul.bf16 %v1110, 1056980736
      %v1115 = vmul.bf16 %v1111, 1056980736
      %v1116 = vmul.bf16 %v1112, 1056980736
      %v1117 = vtanh.bf16.pop %v1114
      %v1118 = vtanh.bf16.pop %v1115
      %v1119 = vtanh.bf16.pop %v1116
      %v1120 = vadd.bf16 %v1117, 1065369472
      %v1121 = vadd.bf16 %v1118, 1065369472
      %v1122 = vadd.bf16 %v1119, 1065369472
      %v1123 = vmul.bf16 %v1120, 1056980736
      %v1124 = vmul.bf16 %v1121, 1056980736
      %v1125 = vmul.bf16 %v1122, 1056980736
      %v1126 = vtanh.bf16.pop %v1113
      %v1127 = vunpack.c.l.bf16 %v1124
      %v1128 = vmul.f32 %v1127, %v1014
      %v1129 = vmul.bf16 %v1123, %v1126
      %v1130 = vunpack.c.l.bf16 %v1129
      %v1131 = vadd.f32 %v1128, %v1130
      %v1132 = vpack.c.bf16 %v1131, %v1131
      %v1133 = vtanh.bf16.pop %v1132
      %v1134 = vmul.bf16 %v1125, %v1133
      %v1135 = vunpack.c.l.bf16 %v1134
      %1136 = vst [vmem:[#allocation3 + $0x8] sm:$0xff] %v1135
      %v1137 = vld [vmem:[#allocation2 + $0x40] sm:$0xff]
      %v1138 = vld [vmem:[#allocation2 + $0x48] sm:$0xff]
      %v1139 = vld [vmem:[#allocation2 + $0x50] sm:$0xff]
      %v1140 = vld [vmem:[#allocation2 + $0x58] sm:$0xff]
      %1141 = vmatprep.subr.bf16.mxu0 %v844
      %1142 = vmatpush1.bf16.msra.mxu0 %v843
      %1143 = vmatprep.subr.bf16.mxu0 %v848
      %1144 = vmatpush1.bf16.msra.mxu0 %v847
      %1145 = vmatprep.subr.bf16.mxu0 %v852
      %1146 = vmatpush1.bf16.msra.mxu0 %v851
      %1147 = vmatprep.subr.bf16.mxu0 %v856
      %1148 = vmatpush1.bf16.msra.mxu0 %v855
      %1149 = vmatprep.subr.bf16.mxu0 %v860
      %1150 = vmatpush1.bf16.msra.mxu0 %v859
      %1151 = vmatprep.subr.bf16.mxu0 %v864
      %1152 = vmatpush1.bf16.msra.mxu0 %v863
      %1153 = vmatprep.subr.bf16.mxu0 %v868
      %1154 = vmatpush1.bf16.msra.mxu0 %v867
      %1155 = vmatprep.subr.bf16.mxu0 %v872
      %1156 = vmatpush1.bf16.msra.mxu0 %v871
      %1157 = vmatprep.subr.bf16.mxu0 0
      %1158 = vmatpush1.bf16.msra.mxu0 0
      %1159 = vmatprep.subr.bf16.mxu0 0
      %1160 = vmatpush1.bf16.msra.mxu0 0
      %1161 = vmatprep.subr.bf16.mxu0 0
      %1162 = vmatpush1.bf16.msra.mxu0 0
      %1163 = vmatprep.subr.bf16.mxu0 0
      %1164 = vmatpush1.bf16.msra.mxu0 0
      %1165 = vmatprep.subr.bf16.mxu0 0
      %1166 = vmatpush1.bf16.msra.mxu0 0
      %1167 = vmatprep.subr.bf16.mxu0 0
      %1168 = vmatpush1.bf16.msra.mxu0 0
      %1169 = vmatprep.subr.bf16.mxu0 0
      %1170 = vmatpush1.bf16.msra.mxu0 0
      %1171 = vmatprep.subr.bf16.mxu0 0
      %1172 = vmatpush1.bf16.msra.mxu0 0
      %1173 = vmatprep.mubr.bf16.mxu0 0
      %1174 = vmatmul.mubr.bf16.gmra.mrb[0].mxu0 %v1134
      %v1175 = vpop.f32.mrb[0].mxu0
      %v1176 = vadd.f32 0.0, %v1175
      %v1177 = vpop.f32.mrb[0].mxu0
      %v1178 = vadd.f32 0.0, %v1177
      %v1179 = vpop.f32.mrb[0].mxu0
      %v1180 = vpop.f32.mrb[0].mxu0
      %1181 = vdwg.mxu0
      %1182 = vmatprep.subr.bf16.mxu0 %v846
      %1183 = vmatpush1.bf16.msra.mxu0 %v845
      %1184 = vmatprep.subr.bf16.mxu0 %v850
      %1185 = vmatpush1.bf16.msra.mxu0 %v849
      %1186 = vmatprep.subr.bf16.mxu0 %v854
      %1187 = vmatpush1.bf16.msra.mxu0 %v853
      %1188 = vmatprep.subr.bf16.mxu0 %v858
      %1189 = vmatpush1.bf16.msra.mxu0 %v857
      %1190 = vmatprep.subr.bf16.mxu0 %v862
      %1191 = vmatpush1.bf16.msra.mxu0 %v861
      %1192 = vmatprep.subr.bf16.mxu0 %v866
      %1193 = vmatpush1.bf16.msra.mxu0 %v865
      %1194 = vmatprep.subr.bf16.mxu0 %v870
      %1195 = vmatpush1.bf16.msra.mxu0 %v869
      %1196 = vmatprep.subr.bf16.mxu0 %v874
      %1197 = vmatpush1.bf16.msra.mxu0 %v873
      %1198 = vmatprep.subr.bf16.mxu0 0
      %1199 = vmatpush1.bf16.msra.mxu0 0
      %1200 = vmatprep.subr.bf16.mxu0 0
      %1201 = vmatpush1.bf16.msra.mxu0 0
      %1202 = vmatprep.subr.bf16.mxu0 0
      %1203 = vmatpush1.bf16.msra.mxu0 0
      %1204 = vmatprep.subr.bf16.mxu0 0
      %1205 = vmatpush1.bf16.msra.mxu0 0
      %1206 = vmatprep.subr.bf16.mxu0 0
      %1207 = vmatpush1.bf16.msra.mxu0 0
      %1208 = vmatprep.subr.bf16.mxu0 0
      %1209 = vmatpush1.bf16.msra.mxu0 0
      %1210 = vmatprep.subr.bf16.mxu0 0
      %1211 = vmatpush1.bf16.msra.mxu0 0
      %1212 = vmatprep.subr.bf16.mxu0 0
      %1213 = vmatpush1.bf16.msra.mxu0 0
      %1214 = vmatprep.mubr.bf16.mxu0 0
      %1215 = vmatmul.mubr.bf16.gmra.mrb[0].mxu0 %v1134
      %v1216 = vpop.f32.mrb[0].mxu0
      %v1217 = vadd.f32 0.0, %v1216
      %v1218 = vpop.f32.mrb[0].mxu0
      %v1219 = vadd.f32 0.0, %v1218
      %v1220 = vpop.f32.mrb[0].mxu0
      %v1221 = vpop.f32.mrb[0].mxu0
      %1222 = vdwg.mxu0
      %v1223 = vadd.f32 %v1137, %v1176
      %v1224 = vadd.f32 %v1138, %v1178
      %v1225 = vadd.f32 %v1139, %v1217
      %v1226 = vadd.f32 %v1140, %v1219
      %v1227 = vpack.c.bf16 %v1223, %v1223
      %v1228 = vpack.c.bf16 %v1224, %v1224
      %v1229 = vpack.c.bf16 %v1225, %v1225
      %v1230 = vpack.c.bf16 %v1226, %v1226
      %v1231 = vmul.bf16 %v1227, 1056980736
      %v1232 = vmul.bf16 %v1228, 1056980736
      %v1233 = vmul.bf16 %v1229, 1056980736
      %v1234 = vtanh.bf16.pop %v1231
      %v1235 = vtanh.bf16.pop %v1232
      %v1236 = vtanh.bf16.pop %v1233
      %v1237 = vadd.bf16 %v1234, 1065369472
      %v1238 = vadd.bf16 %v1235, 1065369472
      %v1239 = vadd.bf16 %v1236, 1065369472
      %v1240 = vmul.bf16 %v1237, 1056980736
      %v1241 = vmul.bf16 %v1238, 1056980736
      %v1242 = vmul.bf16 %v1239, 1056980736
      %v1243 = vtanh.bf16.pop %v1230
      %v1244 = vunpack.c.l.bf16 %v1241
      %v1245 = vmul.f32 %v1244, %v1131
      %v1246 = vmul.bf16 %v1240, %v1243
      %v1247 = vunpack.c.l.bf16 %v1246
      %v1248 = vadd.f32 %v1245, %v1247
      %v1249 = vpack.c.bf16 %v1248, %v1248
      %v1250 = vtanh.bf16.pop %v1249
      %v1251 = vmul.bf16 %v1242, %v1250
      %v1252 = vunpack.c.l.bf16 %v1251
      %1253 = vst [vmem:[#allocation3 + $0x10] sm:$0xff] %v1252
      %v1254 = vld [vmem:[#allocation2 + $0x60] sm:$0xff]
      %v1255 = vld [vmem:[#allocation2 + $0x68] sm:$0xff]
      %v1256 = vld [vmem:[#allocation2 + $0x70] sm:$0xff]
      %v1257 = vld [vmem:[#allocation2 + $0x78] sm:$0xff]
      %1258 = vmatprep.subr.bf16.mxu0 %v844
      %1259 = vmatpush1.bf16.msra.mxu0 %v843
      %1260 = vmatprep.subr.bf16.mxu0 %v848
      %1261 = vmatpush1.bf16.msra.mxu0 %v847
      %1262 = vmatprep.subr.bf16.mxu0 %v852
      %1263 = vmatpush1.bf16.msra.mxu0 %v851
      %1264 = vmatprep.subr.bf16.mxu0 %v856
      %1265 = vmatpush1.bf16.msra.mxu0 %v855
      %1266 = vmatprep.subr.bf16.mxu0 %v860
      %1267 = vmatpush1.bf16.msra.mxu0 %v859
      %1268 = vmatprep.subr.bf16.mxu0 %v864
      %1269 = vmatpush1.bf16.msra.mxu0 %v863
      %1270 = vmatprep.subr.bf16.mxu0 %v868
      %1271 = vmatpush1.bf16.msra.mxu0 %v867
      %1272 = vmatprep.subr.bf16.mxu0 %v872
      %1273 = vmatpush1.bf16.msra.mxu0 %v871
      %1274 = vmatprep.subr.bf16.mxu0 0
      %1275 = vmatpush1.bf16.msra.mxu0 0
      %1276 = vmatprep.subr.bf16.mxu0 0
      %1277 = vmatpush1.bf16.msra.mxu0 0
      %1278 = vmatprep.subr.bf16.mxu0 0
      %1279 = vmatpush1.bf16.msra.mxu0 0
      %1280 = vmatprep.subr.bf16.mxu0 0
      %1281 = vmatpush1.bf16.msra.mxu0 0
      %1282 = vmatprep.subr.bf16.mxu0 0
      %1283 = vmatpush1.bf16.msra.mxu0 0
      %1284 = vmatprep.subr.bf16.mxu0 0
      %1285 = vmatpush1.bf16.msra.mxu0 0
      %1286 = vmatprep.subr.bf16.mxu0 0
      %1287 = vmatpush1.bf16.msra.mxu0 0
      %1288 = vmatprep.subr.bf16.mxu0 0
      %1289 = vmatpush1.bf16.msra.mxu0 0
      %1290 = vmatprep.mubr.bf16.mxu0 0
      %1291 = vmatmul.mubr.bf16.gmra.mrb[0].mxu0 %v1251
      %v1292 = vpop.f32.mrb[0].mxu0
      %v1293 = vadd.f32 0.0, %v1292
      %v1294 = vpop.f32.mrb[0].mxu0
      %v1295 = vadd.f32 0.0, %v1294
      %v1296 = vpop.f32.mrb[0].mxu0
      %v1297 = vpop.f32.mrb[0].mxu0
      %1298 = vdwg.mxu0
      %1299 = vmatprep.subr.bf16.mxu0 %v846
      %1300 = vmatpush1.bf16.msra.mxu0 %v845
      %1301 = vmatprep.subr.bf16.mxu0 %v850
      %1302 = vmatpush1.bf16.msra.mxu0 %v849
      %1303 = vmatprep.subr.bf16.mxu0 %v854
      %1304 = vmatpush1.bf16.msra.mxu0 %v853
      %1305 = vmatprep.subr.bf16.mxu0 %v858
      %1306 = vmatpush1.bf16.msra.mxu0 %v857
      %1307 = vmatprep.subr.bf16.mxu0 %v862
      %1308 = vmatpush1.bf16.msra.mxu0 %v861
      %1309 = vmatprep.subr.bf16.mxu0 %v866
      %1310 = vmatpush1.bf16.msra.mxu0 %v865
      %1311 = vmatprep.subr.bf16.mxu0 %v870
      %1312 = vmatpush1.bf16.msra.mxu0 %v869
      %1313 = vmatprep.subr.bf16.mxu0 %v874
      %1314 = vmatpush1.bf16.msra.mxu0 %v873
      %1315 = vmatprep.subr.bf16.mxu0 0
      %1316 = vmatpush1.bf16.msra.mxu0 0
      %1317 = vmatprep.subr.bf16.mxu0 0
      %1318 = vmatpush1.bf16.msra.mxu0 0
      %1319 = vmatprep.subr.bf16.mxu0 0
      %1320 = vmatpush1.bf16.msra.mxu0 0
      %1321 = vmatprep.subr.bf16.mxu0 0
      %1322 = vmatpush1.bf16.msra.mxu0 0
      %1323 = vmatprep.subr.bf16.mxu0 0
      %1324 = vmatpush1.bf16.msra.mxu0 0
      %1325 = vmatprep.subr.bf16.mxu0 0
      %1326 = vmatpush1.bf16.msra.mxu0 0
      %1327 = vmatprep.subr.bf16.mxu0 0
      %1328 = vmatpush1.bf16.msra.mxu0 0
      %1329 = vmatprep.subr.bf16.mxu0 0
      %1330 = vmatpush1.bf16.msra.mxu0 0
      %1331 = vmatprep.mubr.bf16.mxu0 0
      %1332 = vmatmul.mubr.bf16.gmra.mrb[0].mxu0 %v1251
      %v1333 = vpop.f32.mrb[0].mxu0
      %v1334 = vadd.f32 0.0, %v1333
      %v1335 = vpop.f32.mrb[0].mxu0
      %v1336 = vadd.f32 0.0, %v1335
      %v1337 = vpop.f32.mrb[0].mxu0
      %v1338 = vpop.f32.mrb[0].mxu0
      %1339 = vdwg.mxu0
      %v1340 = vadd.f32 %v1254, %v1293
      %v1341 = vadd.f32 %v1255, %v1295
      %v1342 = vadd.f32 %v1256, %v1334
      %v1343 = vadd.f32 %v1257, %v1336
      %v1344 = vpack.c.bf16 %v1340, %v1340
      %v1345 = vpack.c.bf16 %v1341, %v1341
      %v1346 = vpack.c.bf16 %v1342, %v1342
      %v1347 = vpack.c.bf16 %v1343, %v1343
      %v1348 = vmul.bf16 %v1344, 1056980736
      %v1349 = vmul.bf16 %v1345, 1056980736
      %v1350 = vmul.bf16 %v1346, 1056980736
      %v1351 = vtanh.bf16.pop %v1348
      %v1352 = vtanh.bf16.pop %v1349
      %v1353 = vtanh.bf16.pop %v1350
      %v1354 = vadd.bf16 %v1351, 1065369472
      %v1355 = vadd.bf16 %v1352, 1065369472
      %v1356 = vadd.bf16 %v1353, 1065369472
      %v1357 = vmul.bf16 %v1354, 1056980736
      %v1358 = vmul.bf16 %v1355, 1056980736
      %v1359 = vmul.bf16 %v1356, 1056980736
      %v1360 = vtanh.bf16.pop %v1347
      %v1361 = vunpack.c.l.bf16 %v1358
      %v1362 = vmul.f32 %v1361, %v1248
      %v1363 = vmul.bf16 %v1357, %v1360
      %v1364 = vunpack.c.l.bf16 %v1363
      %v1365 = vadd.f32 %v1362, %v1364
      %v1366 = vpack.c.bf16 %v1365, %v1365
      %v1367 = vtanh.bf16.pop %v1366
      %v1368 = vmul.bf16 %v1359, %v1367
      %v1369 = vunpack.c.l.bf16 %v1368
      %1370 = vst [vmem:[#allocation3 + $0x18] sm:$0xff] %v1369
      %v1371 = vld [vmem:[#allocation2 + $0x80] sm:$0xff]
      %v1372 = vld [vmem:[#allocation2 + $0x88] sm:$0xff]
      %v1373 = vld [vmem:[#allocation2 + $0x90] sm:$0xff]
      %v1374 = vld [vmem:[#allocation2 + $0x98] sm:$0xff]
      %1375 = vmatprep.subr.bf16.mxu0 %v844
      %1376 = vmatpush1.bf16.msra.mxu0 %v843
      %1377 = vmatprep.subr.bf16.mxu0 %v848
      %1378 = vmatpush1.bf16.msra.mxu0 %v847
      %1379 = vmatprep.subr.bf16.mxu0 %v852
      %1380 = vmatpush1.bf16.msra.mxu0 %v851
      %1381 = vmatprep.subr.bf16.mxu0 %v856
      %1382 = vmatpush1.bf16.msra.mxu0 %v855
      %1383 = vmatprep.subr.bf16.mxu0 %v860
      %1384 = vmatpush1.bf16.msra.mxu0 %v859
      %1385 = vmatprep.subr.bf16.mxu0 %v864
      %1386 = vmatpush1.bf16.msra.mxu0 %v863
      %1387 = vmatprep.subr.bf16.mxu0 %v868
      %1388 = vmatpush1.bf16.msra.mxu0 %v867
      %1389 = vmatprep.subr.bf16.mxu0 %v872
      %1390 = vmatpush1.bf16.msra.mxu0 %v871
      %1391 = vmatprep.subr.bf16.mxu0 0
      %1392 = vmatpush1.bf16.msra.mxu0 0
      %1393 = vmatprep.subr.bf16.mxu0 0
      %1394 = vmatpush1.bf16.msra.mxu0 0
      %1395 = vmatprep.subr.bf16.mxu0 0
      %1396 = vmatpush1.bf16.msra.mxu0 0
      %1397 = vmatprep.subr.bf16.mxu0 0
      %1398 = vmatpush1.bf16.msra.mxu0 0
      %1399 = vmatprep.subr.bf16.mxu0 0
      %1400 = vmatpush1.bf16.msra.mxu0 0
      %1401 = vmatprep.subr.bf16.mxu0 0
      %1402 = vmatpush1.bf16.msra.mxu0 0
      %1403 = vmatprep.subr.bf16.mxu0 0
      %1404 = vmatpush1.bf16.msra.mxu0 0
      %1405 = vmatprep.subr.bf16.mxu0 0
      %1406 = vmatpush1.bf16.msra.mxu0 0
      %1407 = vmatprep.mubr.bf16.mxu0 0
      %1408 = vmatmul.mubr.bf16.gmra.mrb[0].mxu0 %v1368
      %v1409 = vpop.f32.mrb[0].mxu0
      %v1410 = vadd.f32 0.0, %v1409
      %v1411 = vpop.f32.mrb[0].mxu0
      %v1412 = vadd.f32 0.0, %v1411
      %v1413 = vpop.f32.mrb[0].mxu0
      %v1414 = vpop.f32.mrb[0].mxu0
      %1415 = vdwg.mxu0
      %1416 = vmatprep.subr.bf16.mxu0 %v846
      %1417 = vmatpush1.bf16.msra.mxu0 %v845
      %1418 = vmatprep.subr.bf16.mxu0 %v850
      %1419 = vmatpush1.bf16.msra.mxu0 %v849
      %1420 = vmatprep.subr.bf16.mxu0 %v854
      %1421 = vmatpush1.bf16.msra.mxu0 %v853
      %1422 = vmatprep.subr.bf16.mxu0 %v858
      %1423 = vmatpush1.bf16.msra.mxu0 %v857
      %1424 = vmatprep.subr.bf16.mxu0 %v862
      %1425 = vmatpush1.bf16.msra.mxu0 %v861
      %1426 = vmatprep.subr.bf16.mxu0 %v866
      %1427 = vmatpush1.bf16.msra.mxu0 %v865
      %1428 = vmatprep.subr.bf16.mxu0 %v870
      %1429 = vmatpush1.bf16.msra.mxu0 %v869
      %1430 = vmatprep.subr.bf16.mxu0 %v874
      %1431 = vmatpush1.bf16.msra.mxu0 %v873
      %1432 = vmatprep.subr.bf16.mxu0 0
      %1433 = vmatpush1.bf16.msra.mxu0 0
      %1434 = vmatprep.subr.bf16.mxu0 0
      %1435 = vmatpush1.bf16.msra.mxu0 0
      %1436 = vmatprep.subr.bf16.mxu0 0
      %1437 = vmatpush1.bf16.msra.mxu0 0
      %1438 = vmatprep.subr.bf16.mxu0 0
      %1439 = vmatpush1.bf16.msra.mxu0 0
      %1440 = vmatprep.subr.bf16.mxu0 0
      %1441 = vmatpush1.bf16.msra.mxu0 0
      %1442 = vmatprep.subr.bf16.mxu0 0
      %1443 = vmatpush1.bf16.msra.mxu0 0
      %1444 = vmatprep.subr.bf16.mxu0 0
      %1445 = vmatpush1.bf16.msra.mxu0 0
      %1446 = vmatprep.subr.bf16.mxu0 0
      %1447 = vmatpush1.bf16.msra.mxu0 0
      %1448 = vmatprep.mubr.bf16.mxu0 0
      %1449 = vmatmul.mubr.bf16.gmra.mrb[0].mxu0 %v1368
      %v1450 = vpop.f32.mrb[0].mxu0
      %v1451 = vadd.f32 0.0, %v1450
      %v1452 = vpop.f32.mrb[0].mxu0
      %v1453 = vadd.f32 0.0, %v1452
      %v1454 = vpop.f32.mrb[0].mxu0
      %v1455 = vpop.f32.mrb[0].mxu0
      %1456 = vdwg.mxu0
      %v1457 = vadd.f32 %v1371, %v1410
      %v1458 = vadd.f32 %v1372, %v1412
      %v1459 = vadd.f32 %v1373, %v1451
      %v1460 = vadd.f32 %v1374, %v1453
      %v1461 = vpack.c.bf16 %v1457, %v1457
      %v1462 = vpack.c.bf16 %v1458, %v1458
      %v1463 = vpack.c.bf16 %v1459, %v1459
      %v1464 = vpack.c.bf16 %v1460, %v1460
      %v1465 = vmul.bf16 %v1461, 1056980736
      %v1466 = vmul.bf16 %v1462, 1056980736
      %v1467 = vmul.bf16 %v1463, 1056980736
      %v1468 = vtanh.bf16.pop %v1465
      %v1469 = vtanh.bf16.pop %v1466
      %v1470 = vtanh.bf16.pop %v1467
      %v1471 = vadd.bf16 %v1468, 1065369472
      %v1472 = vadd.bf16 %v1469, 1065369472
      %v1473 = vadd.bf16 %v1470, 1065369472
      %v1474 = vmul.bf16 %v1471, 1056980736
      %v1475 = vmul.bf16 %v1472, 1056980736
      %v1476 = vmul.bf16 %v1473, 1056980736
      %v1477 = vtanh.bf16.pop %v1464
      %v1478 = vunpack.c.l.bf16 %v1475
      %v1479 = vmul.f32 %v1478, %v1365
      %v1480 = vmul.bf16 %v1474, %v1477
      %v1481 = vunpack.c.l.bf16 %v1480
      %v1482 = vadd.f32 %v1479, %v1481
      %v1483 = vpack.c.bf16 %v1482, %v1482
      %v1484 = vtanh.bf16.pop %v1483
      %v1485 = vmul.bf16 %v1476, %v1484
      %v1486 = vunpack.c.l.bf16 %v1485
      %1487 = vst [vmem:[#allocation3 + $0x20] sm:$0xff] %v1486
      %v1488 = vld [vmem:[#allocation2 + $0xa0] sm:$0xff]
      %v1489 = vld [vmem:[#allocation2 + $0xa8] sm:$0xff]
      %v1490 = vld [vmem:[#allocation2 + $0xb0] sm:$0xff]
      %v1491 = vld [vmem:[#allocation2 + $0xb8] sm:$0xff]
      %1492 = vmatprep.subr.bf16.mxu0 %v844
      %1493 = vmatpush1.bf16.msra.mxu0 %v843
      %1494 = vmatprep.subr.bf16.mxu0 %v848
      %1495 = vmatpush1.bf16.msra.mxu0 %v847
      %1496 = vmatprep.subr.bf16.mxu0 %v852
      %1497 = vmatpush1.bf16.msra.mxu0 %v851
      %1498 = vmatprep.subr.bf16.mxu0 %v856
      %1499 = vmatpush1.bf16.msra.mxu0 %v855
      %1500 = vmatprep.subr.bf16.mxu0 %v860
      %1501 = vmatpush1.bf16.msra.mxu0 %v859
      %1502 = vmatprep.subr.bf16.mxu0 %v864
      %1503 = vmatpush1.bf16.msra.mxu0 %v863
      %1504 = vmatprep.subr.bf16.mxu0 %v868
      %1505 = vmatpush1.bf16.msra.mxu0 %v867
      %1506 = vmatprep.subr.bf16.mxu0 %v872
      %1507 = vmatpush1.bf16.msra.mxu0 %v871
      %1508 = vmatprep.subr.bf16.mxu0 0
      %1509 = vmatpush1.bf16.msra.mxu0 0
      %1510 = vmatprep.subr.bf16.mxu0 0
      %1511 = vmatpush1.bf16.msra.mxu0 0
      %1512 = vmatprep.subr.bf16.mxu0 0
      %1513 = vmatpush1.bf16.msra.mxu0 0
      %1514 = vmatprep.subr.bf16.mxu0 0
      %1515 = vmatpush1.bf16.msra.mxu0 0
      %1516 = vmatprep.subr.bf16.mxu0 0
      %1517 = vmatpush1.bf16.msra.mxu0 0
      %1518 = vmatprep.subr.bf16.mxu0 0
      %1519 = vmatpush1.bf16.msra.mxu0 0
      %1520 = vmatprep.subr.bf16.mxu0 0
      %1521 = vmatpush1.bf16.msra.mxu0 0
      %1522 = vmatprep.subr.bf16.mxu0 0
      %1523 = vmatpush1.bf16.msra.mxu0 0
      %1524 = vmatprep.mubr.bf16.mxu0 0
      %1525 = vmatmul.mubr.bf16.gmra.mrb[0].mxu0 %v1485
      %v1526 = vpop.f32.mrb[0].mxu0
      %v1527 = vadd.f32 0.0, %v1526
      %v1528 = vpop.f32.mrb[0].mxu0
      %v1529 = vadd.f32 0.0, %v1528
      %v1530 = vpop.f32.mrb[0].mxu0
      %v1531 = vpop.f32.mrb[0].mxu0
      %1532 = vdwg.mxu0
      %1533 = vmatprep.subr.bf16.mxu0 %v846
      %1534 = vmatpush1.bf16.msra.mxu0 %v845
      %1535 = vmatprep.subr.bf16.mxu0 %v850
      %1536 = vmatpush1.bf16.msra.mxu0 %v849
      %1537 = vmatprep.subr.bf16.mxu0 %v854
      %1538 = vmatpush1.bf16.msra.mxu0 %v853
      %1539 = vmatprep.subr.bf16.mxu0 %v858
      %1540 = vmatpush1.bf16.msra.mxu0 %v857
      %1541 = vmatprep.subr.bf16.mxu0 %v862
      %1542 = vmatpush1.bf16.msra.mxu0 %v861
      %1543 = vmatprep.subr.bf16.mxu0 %v866
      %1544 = vmatpush1.bf16.msra.mxu0 %v865
      %1545 = vmatprep.subr.bf16.mxu0 %v870
      %1546 = vmatpush1.bf16.msra.mxu0 %v869
      %1547 = vmatprep.subr.bf16.mxu0 %v874
      %1548 = vmatpush1.bf16.msra.mxu0 %v873
      %1549 = vmatprep.subr.bf16.mxu0 0
      %1550 = vmatpush1.bf16.msra.mxu0 0
      %1551 = vmatprep.subr.bf16.mxu0 0
      %1552 = vmatpush1.bf16.msra.mxu0 0
      %1553 = vmatprep.subr.bf16.mxu0 0
      %1554 = vmatpush1.bf16.msra.mxu0 0
      %1555 = vmatprep.subr.bf16.mxu0 0
      %1556 = vmatpush1.bf16.msra.mxu0 0
      %1557 = vmatprep.subr.bf16.mxu0 0
      %1558 = vmatpush1.bf16.msra.mxu0 0
      %1559 = vmatprep.subr.bf16.mxu0 0
      %1560 = vmatpush1.bf16.msra.mxu0 0
      %1561 = vmatprep.subr.bf16.mxu0 0
      %1562 = vmatpush1.bf16.msra.mxu0 0
      %1563 = vmatprep.subr.bf16.mxu0 0
      %1564 = vmatpush1.bf16.msra.mxu0 0
      %1565 = vmatprep.mubr.bf16.mxu0 0
      %1566 = vmatmul.mubr.bf16.gmra.mrb[0].mxu0 %v1485
      %v1567 = vpop.f32.mrb[0].mxu0
      %v1568 = vadd.f32 0.0, %v1567
      %v1569 = vpop.f32.mrb[0].mxu0
      %v1570 = vadd.f32 0.0, %v1569
      %v1571 = vpop.f32.mrb[0].mxu0
      %v1572 = vpop.f32.mrb[0].mxu0
      %1573 = vdwg.mxu0
      %v1574 = vadd.f32 %v1488, %v1527
      %v1575 = vadd.f32 %v1489, %v1529
      %v1576 = vadd.f32 %v1490, %v1568
      %v1577 = vadd.f32 %v1491, %v1570
      %v1578 = vpack.c.bf16 %v1574, %v1574
      %v1579 = vpack.c.bf16 %v1575, %v1575
      %v1580 = vpack.c.bf16 %v1576, %v1576
      %v1581 = vpack.c.bf16 %v1577, %v1577
      %v1582 = vmul.bf16 %v1578, 1056980736
      %v1583 = vmul.bf16 %v1579, 1056980736
      %v1584 = vmul.bf16 %v1580, 1056980736
      %v1585 = vtanh.bf16.pop %v1582
      %v1586 = vtanh.bf16.pop %v1583
      %v1587 = vtanh.bf16.pop %v1584
      %v1588 = vadd.bf16 %v1585, 1065369472
      %v1589 = vadd.bf16 %v1586, 1065369472
      %v1590 = vadd.bf16 %v1587, 1065369472
      %v1591 = vmul.bf16 %v1588, 1056980736
      %v1592 = vmul.bf16 %v1589, 1056980736
      %v1593 = vmul.bf16 %v1590, 1056980736
      %v1594 = vtanh.bf16.pop %v1581
      %v1595 = vunpack.c.l.bf16 %v1592
      %v1596 = vmul.f32 %v1595, %v1482
      %v1597 = vmul.bf16 %v1591, %v1594
      %v1598 = vunpack.c.l.bf16 %v1597
      %v1599 = vadd.f32 %v1596, %v1598
      %v1600 = vpack.c.bf16 %v1599, %v1599
      %v1601 = vtanh.bf16.pop %v1600
      %v1602 = vmul.bf16 %v1593, %v1601
      %v1603 = vunpack.c.l.bf16 %v1602
      %1604 = vst [vmem:[#allocation3 + $0x28] sm:$0xff] %v1603
      %v1605 = vld [vmem:[#allocation2 + $0xc0] sm:$0xff]
      %v1606 = vld [vmem:[#allocation2 + $0xc8] sm:$0xff]
      %v1607 = vld [vmem:[#allocation2 + $0xd0] sm:$0xff]
      %v1608 = vld [vmem:[#allocation2 + $0xd8] sm:$0xff]
      %1609 = vmatprep.subr.bf16.mxu0 %v844
      %1610 = vmatpush1.bf16.msra.mxu0 %v843
      %1611 = vmatprep.subr.bf16.mxu0 %v848
      %1612 = vmatpush1.bf16.msra.mxu0 %v847
      %1613 = vmatprep.subr.bf16.mxu0 %v852
      %1614 = vmatpush1.bf16.msra.mxu0 %v851
      %1615 = vmatprep.subr.bf16.mxu0 %v856
      %1616 = vmatpush1.bf16.msra.mxu0 %v855
      %1617 = vmatprep.subr.bf16.mxu0 %v860
      %1618 = vmatpush1.bf16.msra.mxu0 %v859
      %1619 = vmatprep.subr.bf16.mxu0 %v864
      %1620 = vmatpush1.bf16.msra.mxu0 %v863
      %1621 = vmatprep.subr.bf16.mxu0 %v868
      %1622 = vmatpush1.bf16.msra.mxu0 %v867
      %1623 = vmatprep.subr.bf16.mxu0 %v872
      %1624 = vmatpush1.bf16.msra.mxu0 %v871
      %1625 = vmatprep.subr.bf16.mxu0 0
      %1626 = vmatpush1.bf16.msra.mxu0 0
      %1627 = vmatprep.subr.bf16.mxu0 0
      %1628 = vmatpush1.bf16.msra.mxu0 0
      %1629 = vmatprep.subr.bf16.mxu0 0
      %1630 = vmatpush1.bf16.msra.mxu0 0
      %1631 = vmatprep.subr.bf16.mxu0 0
      %1632 = vmatpush1.bf16.msra.mxu0 0
      %1633 = vmatprep.subr.bf16.mxu0 0
      %1634 = vmatpush1.bf16.msra.mxu0 0
      %1635 = vmatprep.subr.bf16.mxu0 0
      %1636 = vmatpush1.bf16.msra.mxu0 0
      %1637 = vmatprep.subr.bf16.mxu0 0
      %1638 = vmatpush1.bf16.msra.mxu0 0
      %1639 = vmatprep.subr.bf16.mxu0 0
      %1640 = vmatpush1.bf16.msra.mxu0 0
      %1641 = vmatprep.mubr.bf16.mxu0 0
      %1642 = vmatmul.mubr.bf16.gmra.mrb[0].mxu0 %v1602
      %v1643 = vpop.f32.mrb[0].mxu0
      %v1644 = vadd.f32 0.0, %v1643
      %v1645 = vpop.f32.mrb[0].mxu0
      %v1646 = vadd.f32 0.0, %v1645
      %v1647 = vpop.f32.mrb[0].mxu0
      %v1648 = vpop.f32.mrb[0].mxu0
      %1649 = vdwg.mxu0
      %1650 = vmatprep.subr.bf16.mxu0 %v846
      %1651 = vmatpush1.bf16.msra.mxu0 %v845
      %1652 = vmatprep.subr.bf16.mxu0 %v850
      %1653 = vmatpush1.bf16.msra.mxu0 %v849
      %1654 = vmatprep.subr.bf16.mxu0 %v854
      %1655 = vmatpush1.bf16.msra.mxu0 %v853
      %1656 = vmatprep.subr.bf16.mxu0 %v858
      %1657 = vmatpush1.bf16.msra.mxu0 %v857
      %1658 = vmatprep.subr.bf16.mxu0 %v862
      %1659 = vmatpush1.bf16.msra.mxu0 %v861
      %1660 = vmatprep.subr.bf16.mxu0 %v866
      %1661 = vmatpush1.bf16.msra.mxu0 %v865
      %1662 = vmatprep.subr.bf16.mxu0 %v870
      %1663 = vmatpush1.bf16.msra.mxu0 %v869
      %1664 = vmatprep.subr.bf16.mxu0 %v874
      %1665 = vmatpush1.bf16.msra.mxu0 %v873
      %1666 = vmatprep.subr.bf16.mxu0 0
      %1667 = vmatpush1.bf16.msra.mxu0 0
      %1668 = vmatprep.subr.bf16.mxu0 0
      %1669 = vmatpush1.bf16.msra.mxu0 0
      %1670 = vmatprep.subr.bf16.mxu0 0
      %1671 = vmatpush1.bf16.msra.mxu0 0
      %1672 = vmatprep.subr.bf16.mxu0 0
      %1673 = vmatpush1.bf16.msra.mxu0 0
      %1674 = vmatprep.subr.bf16.mxu0 0
      %1675 = vmatpush1.bf16.msra.mxu0 0
      %1676 = vmatprep.subr.bf16.mxu0 0
      %1677 = vmatpush1.bf16.msra.mxu0 0
      %1678 = vmatprep.subr.bf16.mxu0 0
      %1679 = vmatpush1.bf16.msra.mxu0 0
      %1680 = vmatprep.subr.bf16.mxu0 0
      %1681 = vmatpush1.bf16.msra.mxu0 0
      %1682 = vmatprep.mubr.bf16.mxu0 0
      %1683 = vmatmul.mubr.bf16.gmra.mrb[0].mxu0 %v1602
      %v1684 = vpop.f32.mrb[0].mxu0
      %v1685 = vadd.f32 0.0, %v1684
      %v1686 = vpop.f32.mrb[0].mxu0
      %v1687 = vadd.f32 0.0, %v1686
      %v1688 = vpop.f32.mrb[0].mxu0
      %v1689 = vpop.f32.mrb[0].mxu0
      %1690 = vdwg.mxu0
      %v1691 = vadd.f32 %v1605, %v1644
      %v1692 = vadd.f32 %v1606, %v1646
      %v1693 = vadd.f32 %v1607, %v1685
      %v1694 = vadd.f32 %v1608, %v1687
      %v1695 = vpack.c.bf16 %v1691, %v1691
      %v1696 = vpack.c.bf16 %v1692, %v1692
      %v1697 = vpack.c.bf16 %v1693, %v1693
      %v1698 = vpack.c.bf16 %v1694, %v1694
      %v1699 = vmul.bf16 %v1695, 1056980736
      %v1700 = vmul.bf16 %v1696, 1056980736
      %v1701 = vmul.bf16 %v1697, 1056980736
      %v1702 = vtanh.bf16.pop %v1699
      %v1703 = vtanh.bf16.pop %v1700
      %v1704 = vtanh.bf16.pop %v1701
      %v1705 = vadd.bf16 %v1702, 1065369472
      %v1706 = vadd.bf16 %v1703, 1065369472
      %v1707 = vadd.bf16 %v1704, 1065369472
      %v1708 = vmul.bf16 %v1705, 1056980736
      %v1709 = vmul.bf16 %v1706, 1056980736
      %v1710 = vmul.bf16 %v1707, 1056980736
      %v1711 = vtanh.bf16.pop %v1698
      %v1712 = vunpack.c.l.bf16 %v1709
      %v1713 = vmul.f32 %v1712, %v1599
      %v1714 = vmul.bf16 %v1708, %v1711
      %v1715 = vunpack.c.l.bf16 %v1714
      %v1716 = vadd.f32 %v1713, %v1715
      %v1717 = vpack.c.bf16 %v1716, %v1716
      %v1718 = vtanh.bf16.pop %v1717
      %v1719 = vmul.bf16 %v1710, %v1718
      %v1720 = vunpack.c.l.bf16 %v1719
      %1721 = vst [vmem:[#allocation3 + $0x30] sm:$0xff] %v1720
      %v1722 = vld [vmem:[#allocation2 + $0xe0] sm:$0xff]
      %v1723 = vld [vmem:[#allocation2 + $0xe8] sm:$0xff]
      %v1724 = vld [vmem:[#allocation2 + $0xf0] sm:$0xff]
      %v1725 = vld [vmem:[#allocation2 + $0xf8] sm:$0xff]
      %1726 = vmatprep.subr.bf16.mxu0 %v844
      %1727 = vmatpush1.bf16.msra.mxu0 %v843
      %1728 = vmatprep.subr.bf16.mxu0 %v848
      %1729 = vmatpush1.bf16.msra.mxu0 %v847
      %1730 = vmatprep.subr.bf16.mxu0 %v852
      %1731 = vmatpush1.bf16.msra.mxu0 %v851
      %1732 = vmatprep.subr.bf16.mxu0 %v856
      %1733 = vmatpush1.bf16.msra.mxu0 %v855
      %1734 = vmatprep.subr.bf16.mxu0 %v860
      %1735 = vmatpush1.bf16.msra.mxu0 %v859
      %1736 = vmatprep.subr.bf16.mxu0 %v864
      %1737 = vmatpush1.bf16.msra.mxu0 %v863
      %1738 = vmatprep.subr.bf16.mxu0 %v868
      %1739 = vmatpush1.bf16.msra.mxu0 %v867
      %1740 = vmatprep.subr.bf16.mxu0 %v872
      %1741 = vmatpush1.bf16.msra.mxu0 %v871
      %1742 = vmatprep.subr.bf16.mxu0 0
      %1743 = vmatpush1.bf16.msra.mxu0 0
      %1744 = vmatprep.subr.bf16.mxu0 0
      %1745 = vmatpush1.bf16.msra.mxu0 0
      %1746 = vmatprep.subr.bf16.mxu0 0
      %1747 = vmatpush1.bf16.msra.mxu0 0
      %1748 = vmatprep.subr.bf16.mxu0 0
      %1749 = vmatpush1.bf16.msra.mxu0 0
      %1750 = vmatprep.subr.bf16.mxu0 0
      %1751 = vmatpush1.bf16.msra.mxu0 0
      %1752 = vmatprep.subr.bf16.mxu0 0
      %1753 = vmatpush1.bf16.msra.mxu0 0
      %1754 = vmatprep.subr.bf16.mxu0 0
      %1755 = vmatpush1.bf16.msra.mxu0 0
      %1756 = vmatprep.subr.bf16.mxu0 0
      %1757 = vmatpush1.bf16.msra.mxu0 0
      %1758 = vmatprep.mubr.bf16.mxu0 0
      %1759 = vmatmul.mubr.bf16.gmra.mrb[0].mxu0 %v1719
      %v1760 = vpop.f32.mrb[0].mxu0
      %v1761 = vadd.f32 0.0, %v1760
      %v1762 = vpop.f32.mrb[0].mxu0
      %v1763 = vadd.f32 0.0, %v1762
      %v1764 = vpop.f32.mrb[0].mxu0
      %v1765 = vpop.f32.mrb[0].mxu0
      %1766 = vdwg.mxu0
      %1767 = vmatprep.subr.bf16.mxu0 %v846
      %1768 = vmatpush1.bf16.msra.mxu0 %v845
      %1769 = vmatprep.subr.bf16.mxu0 %v850
      %1770 = vmatpush1.bf16.msra.mxu0 %v849
      %1771 = vmatprep.subr.bf16.mxu0 %v854
      %1772 = vmatpush1.bf16.msra.mxu0 %v853
      %1773 = vmatprep.subr.bf16.mxu0 %v858
      %1774 = vmatpush1.bf16.msra.mxu0 %v857
      %1775 = vmatprep.subr.bf16.mxu0 %v862
      %1776 = vmatpush1.bf16.msra.mxu0 %v861
      %1777 = vmatprep.subr.bf16.mxu0 %v866
      %1778 = vmatpush1.bf16.msra.mxu0 %v865
      %1779 = vmatprep.subr.bf16.mxu0 %v870
      %1780 = vmatpush1.bf16.msra.mxu0 %v869
      %1781 = vmatprep.subr.bf16.mxu0 %v874
      %1782 = vmatpush1.bf16.msra.mxu0 %v873
      %1783 = vmatprep.subr.bf16.mxu0 0
      %1784 = vmatpush1.bf16.msra.mxu0 0
      %1785 = vmatprep.subr.bf16.mxu0 0
      %1786 = vmatpush1.bf16.msra.mxu0 0
      %1787 = vmatprep.subr.bf16.mxu0 0
      %1788 = vmatpush1.bf16.msra.mxu0 0
      %1789 = vmatprep.subr.bf16.mxu0 0
      %1790 = vmatpush1.bf16.msra.mxu0 0
      %1791 = vmatprep.subr.bf16.mxu0 0
      %1792 = vmatpush1.bf16.msra.mxu0 0
      %1793 = vmatprep.subr.bf16.mxu0 0
      %1794 = vmatpush1.bf16.msra.mxu0 0
      %1795 = vmatprep.subr.bf16.mxu0 0
      %1796 = vmatpush1.bf16.msra.mxu0 0
      %1797 = vmatprep.subr.bf16.mxu0 0
      %1798 = vmatpush1.bf16.msra.mxu0 0
      %1799 = vmatprep.mubr.bf16.mxu0 0
      %1800 = vmatmul.mubr.bf16.gmra.mrb[0].mxu0 %v1719
      %v1801 = vpop.f32.mrb[0].mxu0
      %v1802 = vadd.f32 0.0, %v1801
      %v1803 = vpop.f32.mrb[0].mxu0
      %v1804 = vadd.f32 0.0, %v1803
      %v1805 = vpop.f32.mrb[0].mxu0
      %v1806 = vpop.f32.mrb[0].mxu0
      %1807 = vdwg.mxu0
      %v1808 = vadd.f32 %v1722, %v1761
      %v1809 = vadd.f32 %v1723, %v1763
      %v1810 = vadd.f32 %v1724, %v1802
      %v1811 = vadd.f32 %v1725, %v1804
      %v1812 = vpack.c.bf16 %v1808, %v1808
      %v1813 = vpack.c.bf16 %v1809, %v1809
      %v1814 = vpack.c.bf16 %v1810, %v1810
      %v1815 = vpack.c.bf16 %v1811, %v1811
      %v1816 = vmul.bf16 %v1812, 1056980736
      %v1817 = vmul.bf16 %v1813, 1056980736
      %v1818 = vmul.bf16 %v1814, 1056980736
      %v1819 = vtanh.bf16.pop %v1816
      %v1820 = vtanh.bf16.pop %v1817
      %v1821 = vtanh.bf16.pop %v1818
      %v1822 = vadd.bf16 %v1819, 1065369472
      %v1823 = vadd.bf16 %v1820, 1065369472
      %v1824 = vadd.bf16 %v1821, 1065369472
      %v1825 = vmul.bf16 %v1822, 1056980736
      %v1826 = vmul.bf16 %v1823, 1056980736
      %v1827 = vmul.bf16 %v1824, 1056980736
      %v1828 = vtanh.bf16.pop %v1815
      %v1829 = vunpack.c.l.bf16 %v1826
      %v1830 = vmul.f32 %v1829, %v1716
      %v1831 = vmul.bf16 %v1825, %v1828
      %v1832 = vunpack.c.l.bf16 %v1831
      %v1833 = vadd.f32 %v1830, %v1832
      %v1834 = vpack.c.bf16 %v1833, %v1833
      %v1835 = vtanh.bf16.pop %v1834
      %v1836 = vmul.bf16 %v1827, %v1835
      %v1837 = vunpack.c.l.bf16 %v1836
      %1838 = vst [vmem:[#allocation3 + $0x38] sm:$0xff] %v1837
      %p1839 = scmp.eq.s32.totalorder %s19, 3
      // Predicated region
      $region49: #{lstm_forward.1} parent=43 // pred_check
        %p1840 = pneg %p1839
      $region50: #{lstm_forward.1} parent=43 // pred_check_branch
        %1842 = sbr.rel (%p1840) target = $region52
      $region51: #{lstm_forward.1} parent=43 // pred_region
        %v1843 = vld [vmem:[%s4] sm:$0xf]
        %v1844 = vld [vmem:[%s4 + $0x4] sm:$0xf]
        %v1845 = vld [vmem:[%s4 + $0x8] sm:$0xf]
        %v1846 = vld [vmem:[%s4 + $0xc] sm:$0xf]
        %v1847 = vld [vmem:[%s4 + $0x10] sm:$0xf]
        %v1848 = vld [vmem:[%s4 + $0x14] sm:$0xf]
        %v1849 = vld [vmem:[%s4 + $0x18] sm:$0xf]
        %v1850 = vld [vmem:[%s4 + $0x1c] sm:$0xf]
        %v1851 = vld [vmem:[%s4 + $0x20] sm:$0xf]
        %v1852 = vld [vmem:[%s4 + $0x24] sm:$0xf]
        %v1853 = vld [vmem:[%s4 + $0x28] sm:$0xf]
        %v1854 = vld [vmem:[%s4 + $0x2c] sm:$0xf]
        %v1855 = vld [vmem:[%s4 + $0x30] sm:$0xf]
        %v1856 = vld [vmem:[%s4 + $0x34] sm:$0xf]
        %v1857 = vld [vmem:[%s4 + $0x38] sm:$0xf]
        %v1858 = vld [vmem:[%s4 + $0x3c] sm:$0xf]
        %v1859 = vld [vmem:[#allocation4] sm:$0x1]
        %v1861 = vlaneseq
        %v1862 = vshrl.u32 %v1861, 7
        %v1863 = vsub.s32 0, %v1862
        %v1864 = vrot.slane %v1859, %v1863
        %v1882 = vunpack.c.l.b16 %v1843
        %v1883 = vunpack.c.l.b16 %v1844
        %v1884 = vunpack.c.l.b16 %v1845
        %v1885 = vunpack.c.l.b16 %v1846
        %v1886 = vunpack.c.l.b16 %v1847
        %v1887 = vunpack.c.l.b16 %v1848
        %v1888 = vunpack.c.l.b16 %v1849
        %v1889 = vunpack.c.l.b16 %v1850
        %v1890 = vunpack.c.l.b16 %v1851
        %v1891 = vunpack.c.l.b16 %v1852
        %v1892 = vunpack.c.l.b16 %v1853
        %v1893 = vunpack.c.l.b16 %v1854
        %v1894 = vunpack.c.l.b16 %v1855
        %v1895 = vunpack.c.l.b16 %v1856
        %v1896 = vunpack.c.l.b16 %v1857
        %v1897 = vunpack.c.l.b16 %v1858
        %v1898 = vpack.c.b16 %v1883, %v1882
        %v1899 = vpack.c.b16 %v1885, %v1884
        %v1900 = vpack.c.b16 %v1887, %v1886
        %v1901 = vpack.c.b16 %v1889, %v1888
        %v1902 = vpack.c.b16 %v1891, %v1890
        %v1903 = vpack.c.b16 %v1893, %v1892
        %v1904 = vpack.c.b16 %v1895, %v1894
        %v1905 = vpack.c.b16 %v1897, %v1896
        %1914 = vmatprep.subr.bf16.mxu0 0
        %1915 = vmatpush1.bf16.msra.mxu0 %v1898
        %1916 = vmatprep.subr.bf16.mxu0 0
        %1917 = vmatpush1.bf16.msra.mxu0 %v1899
        %1918 = vmatprep.subr.bf16.mxu0 0
        %1919 = vmatpush1.bf16.msra.mxu0 %v1900
        %1920 = vmatprep.subr.bf16.mxu0 0
        %1921 = vmatpush1.bf16.msra.mxu0 %v1901
        %1922 = vmatprep.subr.bf16.mxu0 0
        %1923 = vmatpush1.bf16.msra.mxu0 %v1902
        %1924 = vmatprep.subr.bf16.mxu0 0
        %1925 = vmatpush1.bf16.msra.mxu0 %v1903
        %1926 = vmatprep.subr.bf16.mxu0 0
        %1927 = vmatpush1.bf16.msra.mxu0 %v1904
        %1928 = vmatprep.subr.bf16.mxu0 0
        %1929 = vmatpush1.bf16.msra.mxu0 %v1905
        %1930 = vmatprep.subr.bf16.mxu0 0
        %1931 = vmatpush1.bf16.msra.mxu0 0
        %1932 = vmatprep.subr.bf16.mxu0 0
        %1933 = vmatpush1.bf16.msra.mxu0 0
        %1934 = vmatprep.subr.bf16.mxu0 0
        %1935 = vmatpush1.bf16.msra.mxu0 0
        %1936 = vmatprep.subr.bf16.mxu0 0
        %1937 = vmatpush1.bf16.msra.mxu0 0
        %1938 = vmatprep.subr.bf16.mxu0 0
        %1939 = vmatpush1.bf16.msra.mxu0 0
        %1940 = vmatprep.subr.bf16.mxu0 0
        %1941 = vmatpush1.bf16.msra.mxu0 0
        %1942 = vmatprep.subr.bf16.mxu0 0
        %1943 = vmatpush1.bf16.msra.mxu0 0
        %1944 = vmatprep.subr.bf16.mxu0 0
        %1945 = vmatpush1.bf16.msra.mxu0 0
        %1946 = vmatprep.mubr.bf16.mxu0 0
        %1947 = vmatmul.mubr.bf16.gmra.mrb[0].mxu0 %v1836
        %v1948 = vpop.f32.mrb[0].mxu0
        %v1949 = vadd.f32 %v1864, %v1948
        %v1950 = vpop.f32.mrb[0].mxu0
        %v1951 = vpop.f32.mrb[0].mxu0
        %v1952 = vpop.f32.mrb[0].mxu0
        %1953 = vdwg.mxu0
        %vm1954 = vcmask 7168
        %1955 = vst.msk [vmem:[%s6] sm:$0xff] %vm1954, %v1949
      $region52: #{lstm_forward.1} parent=43 // pred_fallthru
        _
      // Predicated region
      $region53: #{lstm_forward.1} parent=43 // pred_check
        %p1956 = pneg %p173
      $region54: #{lstm_forward.1} parent=43 // pred_check_branch
        %1958 = sbr.rel (%p1956) target = $region56
      $region55: #{lstm_forward.1} parent=43 // pred_region
        _
      $region56: #{lstm_forward.1} parent=43 // pred_fallthru
        _
      // Predicated region
      $region57: #{lstm_forward.1} parent=43 // pred_check
        %p1959 = pneg %p173
      $region58: #{lstm_forward.1} parent=43 // pred_check_branch
        %1961 = sbr.rel (%p1959) target = $region60
      $region59: #{lstm_forward.1} parent=43 // pred_region
        _
      $region60: #{lstm_forward.1} parent=43 // pred_fallthru
        _
    $region44: #{lstm_forward.1} parent=5 // pred_fallthru
      _
    %p1962 = scmp.le.s32.totalorder 2, %s14
    // Predicated region
    $region61: #{lstm_forward.1} parent=5 // pred_check
      %p1963 = pneg %p1962
    $region62: #{lstm_forward.1} parent=5 // pred_check_branch
      %1965 = sbr.rel (%p1963) target = $region64
    $region63: #{lstm_forward.1} parent=5 // pred_region
      %s1966 = ssub.s32 %s14, 2
    $region64: #{lstm_forward.1} parent=5 // pred_fallthru
      _
  $region6: #{lstm_forward.1} parent=0 // loop_footer
    %s18 = sadd.s32 1, %s14
  $region7: #{lstm_forward.1} parent=0 // loop_footer_branch
    %13 = sbr.rel target = $region3
  $region8: #{lstm_forward.1} parent=0 // loop_exit
    _

</llo_original>
